<compile_context>
chip_gen: v7x
topology: tpu7x:2x2x1
jax: 0.10.0
libtpu: 0.0.40
codegen_flags: <defaults>
</compile_context>

<pallas_src>
import jax
import jax.numpy as jnp
from jax.experimental import pallas as pl
from jax.experimental.pallas import tpu as pltpu

# ----------------------------- model hyper-params ---------------------------
MAX_LEN = 8          # sequence length
VOCAB = 96           # vocab size
EMBED = 32           # embedding dim
FF_DIM = 64          # feed-forward hidden dim
NUM_HEADS = 2
KEY_DIM = 16         # per-head key dim (num_heads * key_dim == EMBED here)
NUM_LAYERS = 2
BATCH = 2
LN_EPS = 1e-5        # torch.nn.LayerNorm default

LANES = 128
VOCAB_PAD = ((VOCAB + LANES - 1) // LANES) * LANES          # 128
HEAD_DIM_TOTAL = NUM_HEADS * KEY_DIM                        # 32
W_ROWS = 3 * EMBED + LANES                                  # 224 rows / layer
B_ROWS = 8


# ------------------------------ Pallas kernel -------------------------------
def gpt_fused_kernel(tok_ref, tok_emb_ref, pos_emb_ref, w_ref, b_ref,
                     ow_ref, ob_ref, o_ref):
    """Fused GPT forward: embedding gather + all layers + vocab projection.

    tok_ref    : (B, S)            int32 token ids (SMEM, scalar prefetch)
    tok_emb_ref: (VOCAB, E)        f32 token embedding table (VMEM)
    pos_emb_ref: (S, E)            f32 position embedding table (VMEM)
    w_ref      : (L, 3E+128, 128)  bf16 packed weights  [wqkv | wo | w1 | w2pad]
    b_ref      : (L, 8, 128)       f32 packed vectors   [bqkv,bo,g1,be1,b1,b2,g2,be2]
    ow_ref     : (E, 128)          bf16 vocab weight (lane-padded)
    ob_ref     : (1, 128)          f32 vocab bias (lane-padded)
    o_ref      : (N, 128)          f32 lane-dense logits (padded vocab)
    """
    B, S = tok_ref.shape
    E = tok_emb_ref.shape[1]
    HD = HEAD_DIM_TOTAL
    N = B * S
    bf16, f32 = jnp.bfloat16, jnp.float32

    # ---- embedding: in-kernel row gather via dynamic sublane slices ---------
    rows = []
    for bi in range(B):                                   # static unroll (N=16)
        for si in range(S):
            tid = tok_ref[bi, si]                         # SMEM scalar read
            rows.append(tok_emb_ref[pl.ds(tid, 1), :])    # (1, E) dynamic row
    x = jnp.concatenate(rows, axis=0)                     # (N, E) f32
    pos = pos_emb_ref[...]                                # (S, E)
    x = x + jnp.concatenate([pos] * B, axis=0)            # broadcast over batch

    # causal mask / scale built once (shared by all layers & heads)
    row_i = jax.lax.broadcasted_iota(jnp.int32, (S, S), 0)
    col_i = jax.lax.broadcasted_iota(jnp.int32, (S, S), 1)
    causal = (col_i <= row_i)[None, :, :]                 # (1, S, S)
    neg_big = jnp.float32(-1e9)
    scale = jnp.float32(1.0 / (KEY_DIM ** 0.5))

    def layer_norm(y, g, be):                             # f32 throughout
        mu = jnp.mean(y, axis=-1, keepdims=True)
        var = jnp.mean((y - mu) * (y - mu), axis=-1, keepdims=True)
        return (y - mu) * jax.lax.rsqrt(var + LN_EPS) * g + be

    for l in range(NUM_LAYERS):                           # static unroll
        # ---- static slices straight off the refs (free views) --------------
        wqkv = w_ref[l, 0:E, :]                           # (E, 128)  cols 0:96 valid
        wo = w_ref[l, E:2 * E, 0:E]                       # (HD, E)
        w1 = w_ref[l, 2 * E:3 * E, :]                     # (E, 128)  cols 0:64 valid
        w2 = w_ref[l, 3 * E:3 * E + LANES, 0:E]           # (128, E)  rows 64:128 zero

        bqkv = b_ref[l, 0:1, :]                           # (1, 128)
        bo = b_ref[l, 1:2, 0:E]
        g1, be1 = b_ref[l, 2:3, 0:E], b_ref[l, 3:4, 0:E]
        b1 = b_ref[l, 4:5, :]                             # (1, 128) lanes 64: zero
        b2 = b_ref[l, 5:6, 0:E]
        g2, be2 = b_ref[l, 6:7, 0:E], b_ref[l, 7:8, 0:E]

        # ---- fused QKV projection: one lane-padded MXU pass -----------------
        qkv = jnp.dot(x.astype(bf16), wqkv,
                      preferred_element_type=f32) + bqkv  # (N, 128)

        # ---- multi-head causal attention (static 2-head loop) ---------------
        ctx_heads = []
        for h in range(NUM_HEADS):
            lo = h * KEY_DIM
            q_h = qkv[:, lo:lo + KEY_DIM].reshape(B, S, KEY_DIM)
            k_h = qkv[:, HD + lo:HD + lo + KEY_DIM].reshape(B, S, KEY_DIM)
            v_h = qkv[:, 2 * HD + lo:2 * HD + lo + KEY_DIM].reshape(B, S, KEY_DIM)

            s = jnp.einsum('bqd,bkd->bqk',
                           q_h.astype(bf16), k_h.astype(bf16),
                           preferred_element_type=f32) * scale
            s = jnp.where(causal, s, neg_big)
            m = jnp.max(s, axis=-1, keepdims=True)
            p = jnp.exp(s - m)
            p = p * pl.reciprocal(jnp.sum(p, axis=-1, keepdims=True),
                                  approx=True)

            ctx = jnp.einsum('bqk,bkd->bqd',
                             p.astype(bf16), v_h.astype(bf16),
                             preferred_element_type=f32)  # (B, S, D)
            ctx_heads.append(ctx.reshape(N, KEY_DIM))

        # single fused output projection (no per-head accumulate)
        ctx_all = jnp.concatenate(ctx_heads, axis=-1)     # (N, HD)
        attn = jnp.dot(ctx_all.astype(bf16), wo,
                       preferred_element_type=f32) + bo

        out1 = layer_norm(x + attn, g1, be1)

        # ---- feed-forward (lane-dense: 128-wide h1 / ReLU / bias) -----------
        h1 = jnp.dot(out1.astype(bf16), w1,
                     preferred_element_type=f32) + b1     # (N, 128)
        h1 = jnp.maximum(h1, 0.0)
        ffn = jnp.dot(h1.astype(bf16), w2,
                      preferred_element_type=f32) + b2    # (N, E)

        x = layer_norm(out1 + ffn, g2, be2)

    # ---- final vocab projection: lane-dense (128-wide) output store ---------
    logits = jnp.dot(x.astype(bf16), ow_ref[...],
                     preferred_element_type=f32) + ob_ref[...]
    o_ref[...] = logits                                   # (N, 128)


# ------------------------------ param packing -------------------------------
def _pad_cols(a, lanes=LANES):
    return jnp.pad(a, ((0, 0), (0, lanes - a.shape[1])))


def pack_params(params):
    """Pack per-layer params into lane-padded slabs stacked over layers.

    NOTE: the qkv weight AND bias pad columns (96:128) must both be zero so
    the unused lanes of the fused qkv activation stay exactly zero.  Same for
    the FFN pad lanes (w1/b1 cols 64:128) and w2 pad rows (64:128).
    Call once at init -- the result is a pure function of the weights.
    """
    w_layers, b_layers = [], []
    for p in params["layers"]:
        wqkv = jnp.concatenate([p["wq"], p["wk"], p["wv"]], axis=1)   # (E, 3*HD)
        w2_pad = jnp.pad(p["w2"], ((0, LANES - FF_DIM), (0, 0)))      # (128, E)
        w_layers.append(jnp.concatenate([
            _pad_cols(wqkv),        # rows 0      : E
            _pad_cols(p["wo"]),     # rows E      : 2E
            _pad_cols(p["w1"]),     # rows 2E     : 3E
            _pad_cols(w2_pad),      # rows 3E     : 3E+128
        ], axis=0))                                                   # (224, 128)
        bqkv = jnp.concatenate([p["bq"], p["bk"], p["bv"]], axis=1)   # (1, 3*HD)
        b_layers.append(jnp.concatenate([
            _pad_cols(bqkv), _pad_cols(p["bo"]),
            _pad_cols(p["ln1_g"]), _pad_cols(p["ln1_b"]),
            _pad_cols(p["b1"]), _pad_cols(p["b2"]),
            _pad_cols(p["ln2_g"]), _pad_cols(p["ln2_b"]),
        ], axis=0))                                                   # (8, 128)
    w_slab = jnp.stack(w_layers).astype(jnp.bfloat16)    # (L, 224, 128)
    b_slab = jnp.stack(b_layers).astype(jnp.float32)     # (L, 8, 128)
    out_w = _pad_cols(params["out_w"]).astype(jnp.bfloat16)   # (E, 128)
    out_b = _pad_cols(params["out_b"]).astype(jnp.float32)    # (1, 128)
    tok_emb = params["tok_emb"].astype(jnp.float32)      # (VOCAB, E)
    pos_emb = params["pos_emb"].astype(jnp.float32)      # (S, E)
    return tok_emb, pos_emb, w_slab, b_slab, out_w, out_b


# ------------------------------ wrapper --------------------------------------
def _gpt_forward_impl(tokens, packed):
    tok_emb, pos_emb, w_slab, b_slab, out_w, out_b = packed
    n = BATCH * MAX_LEN

    logits_pad = pl.pallas_call(
        gpt_fused_kernel,
        out_shape=jax.ShapeDtypeStruct((n, VOCAB_PAD), jnp.float32),
        grid_spec=pltpu.PrefetchScalarGridSpec(
            num_scalar_prefetch=1,                 # token ids -> SMEM
            grid=(1,),
            in_specs=[
                pl.BlockSpec((VOCAB, EMBED), lambda i, tok: (0, 0)),
                pl.BlockSpec((MAX_LEN, EMBED), lambda i, tok: (0, 0)),
                pl.BlockSpec((NUM_LAYERS, W_ROWS, LANES), lambda i, tok: (0, 0, 0)),
                pl.BlockSpec((NUM_LAYERS, B_ROWS, LANES), lambda i, tok: (0, 0, 0)),
                pl.BlockSpec((EMBED, LANES), lambda i, tok: (0, 0)),
                pl.BlockSpec((1, LANES), lambda i, tok: (0, 0)),
            ],
            out_specs=pl.BlockSpec((n, VOCAB_PAD), lambda i, tok: (0, 0)),
        ),
        compiler_params=pltpu.CompilerParams(
            dimension_semantics=("arbitrary",)),
    )(tokens, tok_emb, pos_emb, w_slab, b_slab, out_w, out_b)

    return logits_pad.reshape(BATCH, MAX_LEN, VOCAB_PAD)[..., :VOCAB]


# jit the whole per-call path (single dispatch; packing is NOT in here)
gpt_forward = jax.jit(_gpt_forward_impl)


# -------------------------- pure-JAX reference (check) -----------------------
def gpt_forward_ref(tokens, params):
    b, s = tokens.shape
    x = params["tok_emb"][tokens] + params["pos_emb"][jnp.arange(s)][None, :, :]
    row = jnp.arange(s)[:, None]
    col = jnp.arange(s)[None, :]
    causal = col <= row

    def ln(y, g, be):
        mu = jnp.mean(y, -1, keepdims=True)
        var = jnp.mean((y - mu) ** 2, -1, keepdims=True)
        return (y - mu) / jnp.sqrt(var + LN_EPS) * g + be

    for p in params["layers"]:
        q = x @ p["wq"] + p["bq"]
        k = x @ p["wk"] + p["bk"]
        v = x @ p["wv"] + p["bv"]
        heads = []
        for h in range(NUM_HEADS):
            sl = slice(h * KEY_DIM, (h + 1) * KEY_DIM)
            sc = jnp.einsum("bqd,bkd->bqk", q[..., sl], k[..., sl]) / jnp.sqrt(
                jnp.float32(KEY_DIM))
            sc = jnp.where(causal, sc, -1e9)
            pr = jax.nn.softmax(sc, axis=-1)
            heads.append(jnp.einsum("bqk,bkd->bqd", pr, v[..., sl]))
        attn = jnp.concatenate(heads, -1) @ p["wo"] + p["bo"]
        out1 = ln(x + attn, p["ln1_g"], p["ln1_b"])
        ffn = jnp.maximum(out1 @ p["w1"] + p["b1"], 0.0) @ p["w2"] + p["b2"]
        x = ln(out1 + ffn, p["ln2_g"], p["ln2_b"])
    return x @ params["out_w"] + params["out_b"]


# ------------------------------ param init -----------------------------------
def init_params(key):
    hd = NUM_HEADS * KEY_DIM
    keys = iter(jax.random.split(key, 64))

    def w(shape, scale=0.02):
        return (scale * jax.random.normal(next(keys), shape)).astype(jnp.float32)

    params = {
        "tok_emb": w((VOCAB, EMBED)),
        "pos_emb": w((MAX_LEN, EMBED)),
        "out_w": w((EMBED, VOCAB)),
        "out_b": jnp.zeros((1, VOCAB), jnp.float32),
        "layers": [],
    }
    for _ in range(NUM_LAYERS):
        params["layers"].append({
            "wq": w((EMBED, hd)), "bq": jnp.zeros((1, hd), jnp.float32),
            "wk": w((EMBED, hd)), "bk": jnp.zeros((1, hd), jnp.float32),
            "wv": w((EMBED, hd)), "bv": jnp.zeros((1, hd), jnp.float32),
            "wo": w((hd, EMBED)), "bo": jnp.zeros((1, EMBED), jnp.float32),
            "ln1_g": jnp.ones((1, EMBED), jnp.float32),
            "ln1_b": jnp.zeros((1, EMBED), jnp.float32),
            "w1": w((EMBED, FF_DIM)), "b1": jnp.zeros((1, FF_DIM), jnp.float32),
            "w2": w((FF_DIM, EMBED)), "b2": jnp.zeros((1, EMBED), jnp.float32),
            "ln2_g": jnp.ones((1, EMBED), jnp.float32),
            "ln2_b": jnp.zeros((1, EMBED), jnp.float32),
        })
    return params


# ---------------------------------- main -------------------------------------
if __name__ == "__main__":
    root = jax.random.PRNGKey(0)
    k_params, k_tokens = jax.random.split(root)
    params = init_params(k_params)
    tokens = jax.random.randint(k_tokens, (BATCH, MAX_LEN), 0, VOCAB,
                                dtype=jnp.int32)

    # Pack once at init (hoisted out of the per-call path).
    packed = jax.tree_util.tree_map(jax.block_until_ready, pack_params(params))

    logits = gpt_forward(tokens, packed)
    logits = jax.block_until_ready(logits)

    ref = gpt_forward_ref(tokens, params)
    assert logits.shape == (BATCH, MAX_LEN, VOCAB)
    assert bool(jnp.all(jnp.isfinite(logits)))
    assert bool(jnp.allclose(logits, ref, rtol=1e-2, atol=1e-2))

    print("KERNEL_OK")
</pallas_src>

<mosaic_0001>
module attributes {stable_mosaic.version = 11 : i64} {
  func.func @gpt_fused_kernel(%arg0: i32, %arg1: memref<2x8xi32, #tpu.memory_space<smem>>, %arg2: memref<96x32xf32, #tpu.memory_space<vmem>>, %arg3: memref<8x32xf32, #tpu.memory_space<vmem>>, %arg4: memref<2x224x128xbf16, #tpu.memory_space<vmem>>, %arg5: memref<2x8x128xf32, #tpu.memory_space<vmem>>, %arg6: memref<32x128xbf16, #tpu.memory_space<vmem>>, %arg7: memref<1x128xf32, #tpu.memory_space<vmem>>, %arg8: memref<16x128xf32, #tpu.memory_space<vmem>>) attributes {dimension_semantics = [#tpu.dimension_semantics<arbitrary>], iteration_bounds = array<i64: 1>, scalar_prefetch = 1 : i64, scratch_operands = 0 : i64, tpu.core_type = #tpu.core_type<tc>, window_params = [{pipeline_mode = #tpu.pipeline_mode<synchronous>, transform_indices = @transform_0, window_bounds = array<i64: 96, 32>}, {pipeline_mode = #tpu.pipeline_mode<synchronous>, transform_indices = @transform_1, window_bounds = array<i64: 8, 32>}, {pipeline_mode = #tpu.pipeline_mode<synchronous>, transform_indices = @transform_2, window_bounds = array<i64: 2, 224, 128>}, {pipeline_mode = #tpu.pipeline_mode<synchronous>, transform_indices = @transform_3, window_bounds = array<i64: 2, 8, 128>}, {pipeline_mode = #tpu.pipeline_mode<synchronous>, transform_indices = @transform_4, window_bounds = array<i64: 32, 128>}, {pipeline_mode = #tpu.pipeline_mode<synchronous>, transform_indices = @transform_5, window_bounds = array<i64: 1, 128>}, {pipeline_mode = #tpu.pipeline_mode<synchronous>, transform_indices = @transform_6, window_bounds = array<i64: 16, 128>}]} {
    %c0 = arith.constant 0 : index
    %c0_0 = arith.constant 0 : index
    %0 = memref.load %arg1[%c0, %c0_0] : memref<2x8xi32, #tpu.memory_space<smem>>
    %1 = arith.index_cast %0 : i32 to index
    %c0_1 = arith.constant 0 : index
    %2 = vector.load %arg2[%1, %c0_1] : memref<96x32xf32, #tpu.memory_space<vmem>>, vector<1x32xf32>
    %c0_2 = arith.constant 0 : index
    %c1 = arith.constant 1 : index
    %3 = memref.load %arg1[%c0_2, %c1] : memref<2x8xi32, #tpu.memory_space<smem>>
    %4 = arith.index_cast %3 : i32 to index
    %c0_3 = arith.constant 0 : index
    %5 = vector.load %arg2[%4, %c0_3] : memref<96x32xf32, #tpu.memory_space<vmem>>, vector<1x32xf32>
    %c0_4 = arith.constant 0 : index
    %c2 = arith.constant 2 : index
    %6 = memref.load %arg1[%c0_4, %c2] : memref<2x8xi32, #tpu.memory_space<smem>>
    %7 = arith.index_cast %6 : i32 to index
    %c0_5 = arith.constant 0 : index
    %8 = vector.load %arg2[%7, %c0_5] : memref<96x32xf32, #tpu.memory_space<vmem>>, vector<1x32xf32>
    %c0_6 = arith.constant 0 : index
    %c3 = arith.constant 3 : index
    %9 = memref.load %arg1[%c0_6, %c3] : memref<2x8xi32, #tpu.memory_space<smem>>
    %10 = arith.index_cast %9 : i32 to index
    %c0_7 = arith.constant 0 : index
    %11 = vector.load %arg2[%10, %c0_7] : memref<96x32xf32, #tpu.memory_space<vmem>>, vector<1x32xf32>
    %c0_8 = arith.constant 0 : index
    %c4 = arith.constant 4 : index
    %12 = memref.load %arg1[%c0_8, %c4] : memref<2x8xi32, #tpu.memory_space<smem>>
    %13 = arith.index_cast %12 : i32 to index
    %c0_9 = arith.constant 0 : index
    %14 = vector.load %arg2[%13, %c0_9] : memref<96x32xf32, #tpu.memory_space<vmem>>, vector<1x32xf32>
    %c0_10 = arith.constant 0 : index
    %c5 = arith.constant 5 : index
    %15 = memref.load %arg1[%c0_10, %c5] : memref<2x8xi32, #tpu.memory_space<smem>>
    %16 = arith.index_cast %15 : i32 to index
    %c0_11 = arith.constant 0 : index
    %17 = vector.load %arg2[%16, %c0_11] : memref<96x32xf32, #tpu.memory_space<vmem>>, vector<1x32xf32>
    %c0_12 = arith.constant 0 : index
    %c6 = arith.constant 6 : index
    %18 = memref.load %arg1[%c0_12, %c6] : memref<2x8xi32, #tpu.memory_space<smem>>
    %19 = arith.index_cast %18 : i32 to index
    %c0_13 = arith.constant 0 : index
    %20 = vector.load %arg2[%19, %c0_13] : memref<96x32xf32, #tpu.memory_space<vmem>>, vector<1x32xf32>
    %c0_14 = arith.constant 0 : index
    %c7 = arith.constant 7 : index
    %21 = memref.load %arg1[%c0_14, %c7] : memref<2x8xi32, #tpu.memory_space<smem>>
    %22 = arith.index_cast %21 : i32 to index
    %c0_15 = arith.constant 0 : index
    %23 = vector.load %arg2[%22, %c0_15] : memref<96x32xf32, #tpu.memory_space<vmem>>, vector<1x32xf32>
    %c1_16 = arith.constant 1 : index
    %c0_17 = arith.constant 0 : index
    %24 = memref.load %arg1[%c1_16, %c0_17] : memref<2x8xi32, #tpu.memory_space<smem>>
    %25 = arith.index_cast %24 : i32 to index
    %c0_18 = arith.constant 0 : index
    %26 = vector.load %arg2[%25, %c0_18] : memref<96x32xf32, #tpu.memory_space<vmem>>, vector<1x32xf32>
    %c1_19 = arith.constant 1 : index
    %c1_20 = arith.constant 1 : index
    %27 = memref.load %arg1[%c1_19, %c1_20] : memref<2x8xi32, #tpu.memory_space<smem>>
    %28 = arith.index_cast %27 : i32 to index
    %c0_21 = arith.constant 0 : index
    %29 = vector.load %arg2[%28, %c0_21] : memref<96x32xf32, #tpu.memory_space<vmem>>, vector<1x32xf32>
    %c1_22 = arith.constant 1 : index
    %c2_23 = arith.constant 2 : index
    %30 = memref.load %arg1[%c1_22, %c2_23] : memref<2x8xi32, #tpu.memory_space<smem>>
    %31 = arith.index_cast %30 : i32 to index
    %c0_24 = arith.constant 0 : index
    %32 = vector.load %arg2[%31, %c0_24] : memref<96x32xf32, #tpu.memory_space<vmem>>, vector<1x32xf32>
    %c1_25 = arith.constant 1 : index
    %c3_26 = arith.constant 3 : index
    %33 = memref.load %arg1[%c1_25, %c3_26] : memref<2x8xi32, #tpu.memory_space<smem>>
    %34 = arith.index_cast %33 : i32 to index
    %c0_27 = arith.constant 0 : index
    %35 = vector.load %arg2[%34, %c0_27] : memref<96x32xf32, #tpu.memory_space<vmem>>, vector<1x32xf32>
    %c1_28 = arith.constant 1 : index
    %c4_29 = arith.constant 4 : index
    %36 = memref.load %arg1[%c1_28, %c4_29] : memref<2x8xi32, #tpu.memory_space<smem>>
    %37 = arith.index_cast %36 : i32 to index
    %c0_30 = arith.constant 0 : index
    %38 = vector.load %arg2[%37, %c0_30] : memref<96x32xf32, #tpu.memory_space<vmem>>, vector<1x32xf32>
    %c1_31 = arith.constant 1 : index
    %c5_32 = arith.constant 5 : index
    %39 = memref.load %arg1[%c1_31, %c5_32] : memref<2x8xi32, #tpu.memory_space<smem>>
    %40 = arith.index_cast %39 : i32 to index
    %c0_33 = arith.constant 0 : index
    %41 = vector.load %arg2[%40, %c0_33] : memref<96x32xf32, #tpu.memory_space<vmem>>, vector<1x32xf32>
    %c1_34 = arith.constant 1 : index
    %c6_35 = arith.constant 6 : index
    %42 = memref.load %arg1[%c1_34, %c6_35] : memref<2x8xi32, #tpu.memory_space<smem>>
    %43 = arith.index_cast %42 : i32 to index
    %c0_36 = arith.constant 0 : index
    %44 = vector.load %arg2[%43, %c0_36] : memref<96x32xf32, #tpu.memory_space<vmem>>, vector<1x32xf32>
    %c1_37 = arith.constant 1 : index
    %c7_38 = arith.constant 7 : index
    %45 = memref.load %arg1[%c1_37, %c7_38] : memref<2x8xi32, #tpu.memory_space<smem>>
    %46 = arith.index_cast %45 : i32 to index
    %c0_39 = arith.constant 0 : index
    %47 = vector.load %arg2[%46, %c0_39] : memref<96x32xf32, #tpu.memory_space<vmem>>, vector<1x32xf32>
    %48 = tpu.concatenate %2, %5, %8, %11, %14, %17, %20, %23, %26, %29, %32, %35, %38, %41, %44, %47 in 0 : vector<1x32xf32>, vector<1x32xf32>, vector<1x32xf32>, vector<1x32xf32>, vector<1x32xf32>, vector<1x32xf32>, vector<1x32xf32>, vector<1x32xf32>, vector<1x32xf32>, vector<1x32xf32>, vector<1x32xf32>, vector<1x32xf32>, vector<1x32xf32>, vector<1x32xf32>, vector<1x32xf32>, vector<1x32xf32> -> vector<16x32xf32>
    %c0_40 = arith.constant 0 : index
    %c0_41 = arith.constant 0 : index
    %49 = vector.load %arg3[%c0_40, %c0_41] : memref<8x32xf32, #tpu.memory_space<vmem>>, vector<8x32xf32>
    %50 = tpu.concatenate %49, %49 in 0 : vector<8x32xf32>, vector<8x32xf32> -> vector<16x32xf32>
    %51 = arith.addf %48, %50 : vector<16x32xf32>
    %52 = tpu.iota {dimensions = array<i32: 0>} : vector<8x8xi32>
    %53 = tpu.iota {dimensions = array<i32: 1>} : vector<8x8xi32>
    %54 = arith.cmpi sle, %53, %52 : vector<8x8xi32>
    %55 = vector.shape_cast %54 : vector<8x8xi1> to vector<1x8x8xi1>
    %c0_42 = arith.constant 0 : index
    %c0_43 = arith.constant 0 : index
    %c0_44 = arith.constant 0 : index
    %56 = vector.load %arg4[%c0_42, %c0_43, %c0_44] : memref<2x224x128xbf16, #tpu.memory_space<vmem>>, vector<1x32x128xbf16>
    %57 = vector.shape_cast %56 : vector<1x32x128xbf16> to vector<32x128xbf16>
    %c0_45 = arith.constant 0 : index
    %c32 = arith.constant 32 : index
    %c0_46 = arith.constant 0 : index
    %58 = vector.load %arg4[%c0_45, %c32, %c0_46] : memref<2x224x128xbf16, #tpu.memory_space<vmem>>, vector<1x32x32xbf16>
    %59 = vector.shape_cast %58 : vector<1x32x32xbf16> to vector<32x32xbf16>
    %c0_47 = arith.constant 0 : index
    %c64 = arith.constant 64 : index
    %c0_48 = arith.constant 0 : index
    %60 = vector.load %arg4[%c0_47, %c64, %c0_48] : memref<2x224x128xbf16, #tpu.memory_space<vmem>>, vector<1x32x128xbf16>
    %61 = vector.shape_cast %60 : vector<1x32x128xbf16> to vector<32x128xbf16>
    %c0_49 = arith.constant 0 : index
    %c96 = arith.constant 96 : index
    %c0_50 = arith.constant 0 : index
    %62 = vector.load %arg4[%c0_49, %c96, %c0_50] : memref<2x224x128xbf16, #tpu.memory_space<vmem>>, vector<1x128x32xbf16>
    %63 = vector.shape_cast %62 : vector<1x128x32xbf16> to vector<128x32xbf16>
    %c0_51 = arith.constant 0 : index
    %c0_52 = arith.constant 0 : index
    %c0_53 = arith.constant 0 : index
    %64 = vector.load %arg5[%c0_51, %c0_52, %c0_53] : memref<2x8x128xf32, #tpu.memory_space<vmem>>, vector<1x1x128xf32>
    %65 = vector.shape_cast %64 : vector<1x1x128xf32> to vector<1x128xf32>
    %c0_54 = arith.constant 0 : index
    %c1_55 = arith.constant 1 : index
    %c0_56 = arith.constant 0 : index
    %66 = vector.load %arg5[%c0_54, %c1_55, %c0_56] : memref<2x8x128xf32, #tpu.memory_space<vmem>>, vector<1x1x32xf32>
    %67 = vector.shape_cast %66 : vector<1x1x32xf32> to vector<1x32xf32>
    %c0_57 = arith.constant 0 : index
    %c2_58 = arith.constant 2 : index
    %c0_59 = arith.constant 0 : index
    %68 = vector.load %arg5[%c0_57, %c2_58, %c0_59] : memref<2x8x128xf32, #tpu.memory_space<vmem>>, vector<1x1x32xf32>
    %69 = vector.shape_cast %68 : vector<1x1x32xf32> to vector<1x32xf32>
    %c0_60 = arith.constant 0 : index
    %c3_61 = arith.constant 3 : index
    %c0_62 = arith.constant 0 : index
    %70 = vector.load %arg5[%c0_60, %c3_61, %c0_62] : memref<2x8x128xf32, #tpu.memory_space<vmem>>, vector<1x1x32xf32>
    %71 = vector.shape_cast %70 : vector<1x1x32xf32> to vector<1x32xf32>
    %c0_63 = arith.constant 0 : index
    %c4_64 = arith.constant 4 : index
    %c0_65 = arith.constant 0 : index
    %72 = vector.load %arg5[%c0_63, %c4_64, %c0_65] : memref<2x8x128xf32, #tpu.memory_space<vmem>>, vector<1x1x128xf32>
    %73 = vector.shape_cast %72 : vector<1x1x128xf32> to vector<1x128xf32>
    %c0_66 = arith.constant 0 : index
    %c5_67 = arith.constant 5 : index
    %c0_68 = arith.constant 0 : index
    %74 = vector.load %arg5[%c0_66, %c5_67, %c0_68] : memref<2x8x128xf32, #tpu.memory_space<vmem>>, vector<1x1x32xf32>
    %75 = vector.shape_cast %74 : vector<1x1x32xf32> to vector<1x32xf32>
    %c0_69 = arith.constant 0 : index
    %c6_70 = arith.constant 6 : index
    %c0_71 = arith.constant 0 : index
    %76 = vector.load %arg5[%c0_69, %c6_70, %c0_71] : memref<2x8x128xf32, #tpu.memory_space<vmem>>, vector<1x1x32xf32>
    %77 = vector.shape_cast %76 : vector<1x1x32xf32> to vector<1x32xf32>
    %c0_72 = arith.constant 0 : index
    %c7_73 = arith.constant 7 : index
    %c0_74 = arith.constant 0 : index
    %78 = vector.load %arg5[%c0_72, %c7_73, %c0_74] : memref<2x8x128xf32, #tpu.memory_space<vmem>>, vector<1x1x32xf32>
    %79 = vector.shape_cast %78 : vector<1x1x32xf32> to vector<1x32xf32>
    %80 = arith.truncf %51 : vector<16x32xf32> to vector<16x32xbf16>
    %cst = arith.constant dense<0.000000e+00> : vector<16x128xf32>
    %81 = tpu.matmul %80, %57, %cst {dimension_numbers = #tpu.dot_dimension_numbers<[1], [0], [0], [1], [0, 0, 1, 1], [], []>} : vector<16x32xbf16>, vector<32x128xbf16>, vector<16x128xf32> -> vector<16x128xf32>
    %82 = vector.broadcast %65 : vector<1x128xf32> to vector<16x128xf32>
    %83 = arith.addf %81, %82 : vector<16x128xf32>
    %84 = vector.extract_strided_slice %83 {offsets = [0, 0], sizes = [16, 16], strides = [1, 1]} : vector<16x128xf32> to vector<16x16xf32>
    %85 = vector.shape_cast %84 : vector<16x16xf32> to vector<2x8x16xf32>
    %86 = vector.extract_strided_slice %83 {offsets = [0, 32], sizes = [16, 16], strides = [1, 1]} : vector<16x128xf32> to vector<16x16xf32>
    %87 = vector.shape_cast %86 : vector<16x16xf32> to vector<2x8x16xf32>
    %88 = vector.extract_strided_slice %83 {offsets = [0, 64], sizes = [16, 16], strides = [1, 1]} : vector<16x128xf32> to vector<16x16xf32>
    %89 = vector.shape_cast %88 : vector<16x16xf32> to vector<2x8x16xf32>
    %90 = arith.truncf %85 : vector<2x8x16xf32> to vector<2x8x16xbf16>
    %91 = arith.truncf %87 : vector<2x8x16xf32> to vector<2x8x16xbf16>
    "tpu.trace_start"() <{level = 10 : i32, message = "bqd,bkd->bqk"}> : () -> ()
    %cst_75 = arith.constant dense<0.000000e+00> : vector<2x8x8xf32>
    %92 = tpu.matmul %90, %91, %cst_75 {dimension_numbers = #tpu.dot_dimension_numbers<[2], [2], [1], [1], [0, 0, 0, 1, 1, 1], [0], [0]>} : vector<2x8x16xbf16>, vector<2x8x16xbf16>, vector<2x8x8xf32> -> vector<2x8x8xf32>
    "tpu.trace_stop"() : () -> ()
    %cst_76 = arith.constant 2.500000e-01 : f32
    %93 = vector.broadcast %cst_76 : f32 to vector<2x8x8xf32>
    %94 = arith.mulf %92, %93 : vector<2x8x8xf32>
    %cst_77 = arith.constant -1.000000e+09 : f32
    %95 = vector.shape_cast %55 : vector<1x8x8xi1> to vector<1x8x8xi1>
    %96 = vector.broadcast %95 : vector<1x8x8xi1> to vector<2x8x8xi1>
    %97 = vector.broadcast %cst_77 : f32 to vector<2x8x8xf32>
    %98 = arith.select %96, %94, %97 : vector<2x8x8xi1>, vector<2x8x8xf32>
    %cst_78 = arith.constant dense<0xFF800000> : vector<2x8xf32>
    %99 = vector.multi_reduction <maximumf>, %98, %cst_78 [2] : vector<2x8x8xf32> to vector<2x8xf32>
    %100 = vector.shape_cast %99 : vector<2x8xf32> to vector<2x8x1xf32>
    %101 = vector.broadcast %100 : vector<2x8x1xf32> to vector<2x8x8xf32>
    %102 = arith.subf %98, %101 : vector<2x8x8xf32>
    %103 = math.exp %102 : vector<2x8x8xf32>
    %cst_79 = arith.constant dense<0.000000e+00> : vector<2x8xf32>
    %104 = vector.multi_reduction <add>, %103, %cst_79 [2] : vector<2x8x8xf32> to vector<2x8xf32>
    %105 = vector.shape_cast %104 : vector<2x8xf32> to vector<2x8x1xf32>
    %106 = tpu.reciprocal %105 {approx = true} : vector<2x8x1xf32> -> vector<2x8x1xf32>
    %107 = vector.broadcast %106 : vector<2x8x1xf32> to vector<2x8x8xf32>
    %108 = arith.mulf %103, %107 : vector<2x8x8xf32>
    %109 = arith.truncf %108 : vector<2x8x8xf32> to vector<2x8x8xbf16>
    %110 = arith.truncf %89 : vector<2x8x16xf32> to vector<2x8x16xbf16>
    "tpu.trace_start"() <{level = 10 : i32, message = "bqk,bkd->bqd"}> : () -> ()
    %cst_80 = arith.constant dense<0.000000e+00> : vector<2x8x16xf32>
    %111 = tpu.matmul %109, %110, %cst_80 {dimension_numbers = #tpu.dot_dimension_numbers<[2], [1], [1], [2], [0, 0, 0, 1, 1, 2], [0], [0]>} : vector<2x8x8xbf16>, vector<2x8x16xbf16>, vector<2x8x16xf32> -> vector<2x8x16xf32>
    "tpu.trace_stop"() : () -> ()
    %112 = vector.shape_cast %111 : vector<2x8x16xf32> to vector<16x16xf32>
    %113 = vector.extract_strided_slice %83 {offsets = [0, 16], sizes = [16, 16], strides = [1, 1]} : vector<16x128xf32> to vector<16x16xf32>
    %114 = vector.shape_cast %113 : vector<16x16xf32> to vector<2x8x16xf32>
    %115 = vector.extract_strided_slice %83 {offsets = [0, 48], sizes = [16, 16], strides = [1, 1]} : vector<16x128xf32> to vector<16x16xf32>
    %116 = vector.shape_cast %115 : vector<16x16xf32> to vector<2x8x16xf32>
    %117 = vector.extract_strided_slice %83 {offsets = [0, 80], sizes = [16, 16], strides = [1, 1]} : vector<16x128xf32> to vector<16x16xf32>
    %118 = vector.shape_cast %117 : vector<16x16xf32> to vector<2x8x16xf32>
    %119 = arith.truncf %114 : vector<2x8x16xf32> to vector<2x8x16xbf16>
    %120 = arith.truncf %116 : vector<2x8x16xf32> to vector<2x8x16xbf16>
    "tpu.trace_start"() <{level = 10 : i32, message = "bqd,bkd->bqk"}> : () -> ()
    %cst_81 = arith.constant dense<0.000000e+00> : vector<2x8x8xf32>
    %121 = tpu.matmul %119, %120, %cst_81 {dimension_numbers = #tpu.dot_dimension_numbers<[2], [2], [1], [1], [0, 0, 0, 1, 1, 1], [0], [0]>} : vector<2x8x16xbf16>, vector<2x8x16xbf16>, vector<2x8x8xf32> -> vector<2x8x8xf32>
    "tpu.trace_stop"() : () -> ()
    %cst_82 = arith.constant 2.500000e-01 : f32
    %122 = vector.broadcast %cst_82 : f32 to vector<2x8x8xf32>
    %123 = arith.mulf %121, %122 : vector<2x8x8xf32>
    %cst_83 = arith.constant -1.000000e+09 : f32
    %124 = vector.shape_cast %55 : vector<1x8x8xi1> to vector<1x8x8xi1>
    %125 = vector.broadcast %124 : vector<1x8x8xi1> to vector<2x8x8xi1>
    %126 = vector.broadcast %cst_83 : f32 to vector<2x8x8xf32>
    %127 = arith.select %125, %123, %126 : vector<2x8x8xi1>, vector<2x8x8xf32>
    %cst_84 = arith.constant dense<0xFF800000> : vector<2x8xf32>
    %128 = vector.multi_reduction <maximumf>, %127, %cst_84 [2] : vector<2x8x8xf32> to vector<2x8xf32>
    %129 = vector.shape_cast %128 : vector<2x8xf32> to vector<2x8x1xf32>
    %130 = vector.broadcast %129 : vector<2x8x1xf32> to vector<2x8x8xf32>
    %131 = arith.subf %127, %130 : vector<2x8x8xf32>
    %132 = math.exp %131 : vector<2x8x8xf32>
    %cst_85 = arith.constant dense<0.000000e+00> : vector<2x8xf32>
    %133 = vector.multi_reduction <add>, %132, %cst_85 [2] : vector<2x8x8xf32> to vector<2x8xf32>
    %134 = vector.shape_cast %133 : vector<2x8xf32> to vector<2x8x1xf32>
    %135 = tpu.reciprocal %134 {approx = true} : vector<2x8x1xf32> -> vector<2x8x1xf32>
    %136 = vector.broadcast %135 : vector<2x8x1xf32> to vector<2x8x8xf32>
    %137 = arith.mulf %132, %136 : vector<2x8x8xf32>
    %138 = arith.truncf %137 : vector<2x8x8xf32> to vector<2x8x8xbf16>
    %139 = arith.truncf %118 : vector<2x8x16xf32> to vector<2x8x16xbf16>
    "tpu.trace_start"() <{level = 10 : i32, message = "bqk,bkd->bqd"}> : () -> ()
    %cst_86 = arith.constant dense<0.000000e+00> : vector<2x8x16xf32>
    %140 = tpu.matmul %138, %139, %cst_86 {dimension_numbers = #tpu.dot_dimension_numbers<[2], [1], [1], [2], [0, 0, 0, 1, 1, 2], [0], [0]>} : vector<2x8x8xbf16>, vector<2x8x16xbf16>, vector<2x8x16xf32> -> vector<2x8x16xf32>
    "tpu.trace_stop"() : () -> ()
    %141 = vector.shape_cast %140 : vector<2x8x16xf32> to vector<16x16xf32>
    %142 = tpu.concatenate %112, %141 in 1 : vector<16x16xf32>, vector<16x16xf32> -> vector<16x32xf32>
    %143 = arith.truncf %142 : vector<16x32xf32> to vector<16x32xbf16>
    %cst_87 = arith.constant dense<0.000000e+00> : vector<16x32xf32>
    %144 = tpu.matmul %143, %59, %cst_87 {dimension_numbers = #tpu.dot_dimension_numbers<[1], [0], [0], [1], [0, 0, 1, 1], [], []>} : vector<16x32xbf16>, vector<32x32xbf16>, vector<16x32xf32> -> vector<16x32xf32>
    %145 = vector.broadcast %67 : vector<1x32xf32> to vector<16x32xf32>
    %146 = arith.addf %144, %145 : vector<16x32xf32>
    %147 = arith.addf %51, %146 : vector<16x32xf32>
    %cst_88 = arith.constant dense<0.000000e+00> : vector<16xf32>
    %148 = vector.multi_reduction <add>, %147, %cst_88 [1] : vector<16x32xf32> to vector<16xf32>
    %149 = vector.shape_cast %148 : vector<16xf32> to vector<16x1xf32>
    %cst_89 = arith.constant 3.200000e+01 : f32
    %150 = vector.broadcast %cst_89 : f32 to vector<16x1xf32>
    %151 = arith.divf %149, %150 : vector<16x1xf32>
    %152 = vector.broadcast %151 : vector<16x1xf32> to vector<16x32xf32>
    %153 = arith.subf %147, %152 : vector<16x32xf32>
    %154 = vector.broadcast %151 : vector<16x1xf32> to vector<16x32xf32>
    %155 = arith.subf %147, %154 : vector<16x32xf32>
    %156 = arith.mulf %153, %155 : vector<16x32xf32>
    %cst_90 = arith.constant dense<0.000000e+00> : vector<16xf32>
    %157 = vector.multi_reduction <add>, %156, %cst_90 [1] : vector<16x32xf32> to vector<16xf32>
    %158 = vector.shape_cast %157 : vector<16xf32> to vector<16x1xf32>
    %cst_91 = arith.constant 3.200000e+01 : f32
    %159 = vector.broadcast %cst_91 : f32 to vector<16x1xf32>
    %160 = arith.divf %158, %159 : vector<16x1xf32>
    %161 = vector.broadcast %151 : vector<16x1xf32> to vector<16x32xf32>
    %162 = arith.subf %147, %161 : vector<16x32xf32>
    %cst_92 = arith.constant 9.99999974E-6 : f32
    %163 = vector.broadcast %cst_92 : f32 to vector<16x1xf32>
    %164 = arith.addf %160, %163 : vector<16x1xf32>
    %165 = math.rsqrt %164 : vector<16x1xf32>
    %166 = vector.broadcast %165 : vector<16x1xf32> to vector<16x32xf32>
    %167 = arith.mulf %162, %166 : vector<16x32xf32>
    %168 = vector.broadcast %69 : vector<1x32xf32> to vector<16x32xf32>
    %169 = arith.mulf %167, %168 : vector<16x32xf32>
    %170 = vector.broadcast %71 : vector<1x32xf32> to vector<16x32xf32>
    %171 = arith.addf %169, %170 : vector<16x32xf32>
    %172 = arith.truncf %171 : vector<16x32xf32> to vector<16x32xbf16>
    %cst_93 = arith.constant dense<0.000000e+00> : vector<16x128xf32>
    %173 = tpu.matmul %172, %61, %cst_93 {dimension_numbers = #tpu.dot_dimension_numbers<[1], [0], [0], [1], [0, 0, 1, 1], [], []>} : vector<16x32xbf16>, vector<32x128xbf16>, vector<16x128xf32> -> vector<16x128xf32>
    %174 = vector.broadcast %73 : vector<1x128xf32> to vector<16x128xf32>
    %175 = arith.addf %173, %174 : vector<16x128xf32>
    %cst_94 = arith.constant 0.000000e+00 : f32
    %176 = vector.broadcast %cst_94 : f32 to vector<16x128xf32>
    %177 = arith.maximumf %175, %176 : vector<16x128xf32>
    %178 = arith.truncf %177 : vector<16x128xf32> to vector<16x128xbf16>
    %cst_95 = arith.constant dense<0.000000e+00> : vector<16x32xf32>
    %179 = tpu.matmul %178, %63, %cst_95 {dimension_numbers = #tpu.dot_dimension_numbers<[1], [0], [0], [1], [0, 0, 1, 1], [], []>} : vector<16x128xbf16>, vector<128x32xbf16>, vector<16x32xf32> -> vector<16x32xf32>
    %180 = vector.broadcast %75 : vector<1x32xf32> to vector<16x32xf32>
    %181 = arith.addf %179, %180 : vector<16x32xf32>
    %182 = arith.addf %171, %181 : vector<16x32xf32>
    %cst_96 = arith.constant dense<0.000000e+00> : vector<16xf32>
    %183 = vector.multi_reduction <add>, %182, %cst_96 [1] : vector<16x32xf32> to vector<16xf32>
    %184 = vector.shape_cast %183 : vector<16xf32> to vector<16x1xf32>
    %cst_97 = arith.constant 3.200000e+01 : f32
    %185 = vector.broadcast %cst_97 : f32 to vector<16x1xf32>
    %186 = arith.divf %184, %185 : vector<16x1xf32>
    %187 = vector.broadcast %186 : vector<16x1xf32> to vector<16x32xf32>
    %188 = arith.subf %182, %187 : vector<16x32xf32>
    %189 = vector.broadcast %186 : vector<16x1xf32> to vector<16x32xf32>
    %190 = arith.subf %182, %189 : vector<16x32xf32>
    %191 = arith.mulf %188, %190 : vector<16x32xf32>
    %cst_98 = arith.constant dense<0.000000e+00> : vector<16xf32>
    %192 = vector.multi_reduction <add>, %191, %cst_98 [1] : vector<16x32xf32> to vector<16xf32>
    %193 = vector.shape_cast %192 : vector<16xf32> to vector<16x1xf32>
    %cst_99 = arith.constant 3.200000e+01 : f32
    %194 = vector.broadcast %cst_99 : f32 to vector<16x1xf32>
    %195 = arith.divf %193, %194 : vector<16x1xf32>
    %196 = vector.broadcast %186 : vector<16x1xf32> to vector<16x32xf32>
    %197 = arith.subf %182, %196 : vector<16x32xf32>
    %cst_100 = arith.constant 9.99999974E-6 : f32
    %198 = vector.broadcast %cst_100 : f32 to vector<16x1xf32>
    %199 = arith.addf %195, %198 : vector<16x1xf32>
    %200 = math.rsqrt %199 : vector<16x1xf32>
    %201 = vector.broadcast %200 : vector<16x1xf32> to vector<16x32xf32>
    %202 = arith.mulf %197, %201 : vector<16x32xf32>
    %203 = vector.broadcast %77 : vector<1x32xf32> to vector<16x32xf32>
    %204 = arith.mulf %202, %203 : vector<16x32xf32>
    %205 = vector.broadcast %79 : vector<1x32xf32> to vector<16x32xf32>
    %206 = arith.addf %204, %205 : vector<16x32xf32>
    %c1_101 = arith.constant 1 : index
    %c0_102 = arith.constant 0 : index
    %c0_103 = arith.constant 0 : index
    %207 = vector.load %arg4[%c1_101, %c0_102, %c0_103] : memref<2x224x128xbf16, #tpu.memory_space<vmem>>, vector<1x32x128xbf16>
    %208 = vector.shape_cast %207 : vector<1x32x128xbf16> to vector<32x128xbf16>
    %c1_104 = arith.constant 1 : index
    %c32_105 = arith.constant 32 : index
    %c0_106 = arith.constant 0 : index
    %209 = vector.load %arg4[%c1_104, %c32_105, %c0_106] : memref<2x224x128xbf16, #tpu.memory_space<vmem>>, vector<1x32x32xbf16>
    %210 = vector.shape_cast %209 : vector<1x32x32xbf16> to vector<32x32xbf16>
    %c1_107 = arith.constant 1 : index
    %c64_108 = arith.constant 64 : index
    %c0_109 = arith.constant 0 : index
    %211 = vector.load %arg4[%c1_107, %c64_108, %c0_109] : memref<2x224x128xbf16, #tpu.memory_space<vmem>>, vector<1x32x128xbf16>
    %212 = vector.shape_cast %211 : vector<1x32x128xbf16> to vector<32x128xbf16>
    %c1_110 = arith.constant 1 : index
    %c96_111 = arith.constant 96 : index
    %c0_112 = arith.constant 0 : index
    %213 = vector.load %arg4[%c1_110, %c96_111, %c0_112] : memref<2x224x128xbf16, #tpu.memory_space<vmem>>, vector<1x128x32xbf16>
    %214 = vector.shape_cast %213 : vector<1x128x32xbf16> to vector<128x32xbf16>
    %c1_113 = arith.constant 1 : index
    %c0_114 = arith.constant 0 : index
    %c0_115 = arith.constant 0 : index
    %215 = vector.load %arg5[%c1_113, %c0_114, %c0_115] : memref<2x8x128xf32, #tpu.memory_space<vmem>>, vector<1x1x128xf32>
    %216 = vector.shape_cast %215 : vector<1x1x128xf32> to vector<1x128xf32>
    %c1_116 = arith.constant 1 : index
    %c1_117 = arith.constant 1 : index
    %c0_118 = arith.constant 0 : index
    %217 = vector.load %arg5[%c1_116, %c1_117, %c0_118] : memref<2x8x128xf32, #tpu.memory_space<vmem>>, vector<1x1x32xf32>
    %218 = vector.shape_cast %217 : vector<1x1x32xf32> to vector<1x32xf32>
    %c1_119 = arith.constant 1 : index
    %c2_120 = arith.constant 2 : index
    %c0_121 = arith.constant 0 : index
    %219 = vector.load %arg5[%c1_119, %c2_120, %c0_121] : memref<2x8x128xf32, #tpu.memory_space<vmem>>, vector<1x1x32xf32>
    %220 = vector.shape_cast %219 : vector<1x1x32xf32> to vector<1x32xf32>
    %c1_122 = arith.constant 1 : index
    %c3_123 = arith.constant 3 : index
    %c0_124 = arith.constant 0 : index
    %221 = vector.load %arg5[%c1_122, %c3_123, %c0_124] : memref<2x8x128xf32, #tpu.memory_space<vmem>>, vector<1x1x32xf32>
    %222 = vector.shape_cast %221 : vector<1x1x32xf32> to vector<1x32xf32>
    %c1_125 = arith.constant 1 : index
    %c4_126 = arith.constant 4 : index
    %c0_127 = arith.constant 0 : index
    %223 = vector.load %arg5[%c1_125, %c4_126, %c0_127] : memref<2x8x128xf32, #tpu.memory_space<vmem>>, vector<1x1x128xf32>
    %224 = vector.shape_cast %223 : vector<1x1x128xf32> to vector<1x128xf32>
    %c1_128 = arith.constant 1 : index
    %c5_129 = arith.constant 5 : index
    %c0_130 = arith.constant 0 : index
    %225 = vector.load %arg5[%c1_128, %c5_129, %c0_130] : memref<2x8x128xf32, #tpu.memory_space<vmem>>, vector<1x1x32xf32>
    %226 = vector.shape_cast %225 : vector<1x1x32xf32> to vector<1x32xf32>
    %c1_131 = arith.constant 1 : index
    %c6_132 = arith.constant 6 : index
    %c0_133 = arith.constant 0 : index
    %227 = vector.load %arg5[%c1_131, %c6_132, %c0_133] : memref<2x8x128xf32, #tpu.memory_space<vmem>>, vector<1x1x32xf32>
    %228 = vector.shape_cast %227 : vector<1x1x32xf32> to vector<1x32xf32>
    %c1_134 = arith.constant 1 : index
    %c7_135 = arith.constant 7 : index
    %c0_136 = arith.constant 0 : index
    %229 = vector.load %arg5[%c1_134, %c7_135, %c0_136] : memref<2x8x128xf32, #tpu.memory_space<vmem>>, vector<1x1x32xf32>
    %230 = vector.shape_cast %229 : vector<1x1x32xf32> to vector<1x32xf32>
    %231 = arith.truncf %206 : vector<16x32xf32> to vector<16x32xbf16>
    %cst_137 = arith.constant dense<0.000000e+00> : vector<16x128xf32>
    %232 = tpu.matmul %231, %208, %cst_137 {dimension_numbers = #tpu.dot_dimension_numbers<[1], [0], [0], [1], [0, 0, 1, 1], [], []>} : vector<16x32xbf16>, vector<32x128xbf16>, vector<16x128xf32> -> vector<16x128xf32>
    %233 = vector.broadcast %216 : vector<1x128xf32> to vector<16x128xf32>
    %234 = arith.addf %232, %233 : vector<16x128xf32>
    %235 = vector.extract_strided_slice %234 {offsets = [0, 0], sizes = [16, 16], strides = [1, 1]} : vector<16x128xf32> to vector<16x16xf32>
    %236 = vector.shape_cast %235 : vector<16x16xf32> to vector<2x8x16xf32>
    %237 = vector.extract_strided_slice %234 {offsets = [0, 32], sizes = [16, 16], strides = [1, 1]} : vector<16x128xf32> to vector<16x16xf32>
    %238 = vector.shape_cast %237 : vector<16x16xf32> to vector<2x8x16xf32>
    %239 = vector.extract_strided_slice %234 {offsets = [0, 64], sizes = [16, 16], strides = [1, 1]} : vector<16x128xf32> to vector<16x16xf32>
    %240 = vector.shape_cast %239 : vector<16x16xf32> to vector<2x8x16xf32>
    %241 = arith.truncf %236 : vector<2x8x16xf32> to vector<2x8x16xbf16>
    %242 = arith.truncf %238 : vector<2x8x16xf32> to vector<2x8x16xbf16>
    "tpu.trace_start"() <{level = 10 : i32, message = "bqd,bkd->bqk"}> : () -> ()
    %cst_138 = arith.constant dense<0.000000e+00> : vector<2x8x8xf32>
    %243 = tpu.matmul %241, %242, %cst_138 {dimension_numbers = #tpu.dot_dimension_numbers<[2], [2], [1], [1], [0, 0, 0, 1, 1, 1], [0], [0]>} : vector<2x8x16xbf16>, vector<2x8x16xbf16>, vector<2x8x8xf32> -> vector<2x8x8xf32>
    "tpu.trace_stop"() : () -> ()
    %cst_139 = arith.constant 2.500000e-01 : f32
    %244 = vector.broadcast %cst_139 : f32 to vector<2x8x8xf32>
    %245 = arith.mulf %243, %244 : vector<2x8x8xf32>
    %cst_140 = arith.constant -1.000000e+09 : f32
    %246 = vector.shape_cast %55 : vector<1x8x8xi1> to vector<1x8x8xi1>
    %247 = vector.broadcast %246 : vector<1x8x8xi1> to vector<2x8x8xi1>
    %248 = vector.broadcast %cst_140 : f32 to vector<2x8x8xf32>
    %249 = arith.select %247, %245, %248 : vector<2x8x8xi1>, vector<2x8x8xf32>
    %cst_141 = arith.constant dense<0xFF800000> : vector<2x8xf32>
    %250 = vector.multi_reduction <maximumf>, %249, %cst_141 [2] : vector<2x8x8xf32> to vector<2x8xf32>
    %251 = vector.shape_cast %250 : vector<2x8xf32> to vector<2x8x1xf32>
    %252 = vector.broadcast %251 : vector<2x8x1xf32> to vector<2x8x8xf32>
    %253 = arith.subf %249, %252 : vector<2x8x8xf32>
    %254 = math.exp %253 : vector<2x8x8xf32>
    %cst_142 = arith.constant dense<0.000000e+00> : vector<2x8xf32>
    %255 = vector.multi_reduction <add>, %254, %cst_142 [2] : vector<2x8x8xf32> to vector<2x8xf32>
    %256 = vector.shape_cast %255 : vector<2x8xf32> to vector<2x8x1xf32>
    %257 = tpu.reciprocal %256 {approx = true} : vector<2x8x1xf32> -> vector<2x8x1xf32>
    %258 = vector.broadcast %257 : vector<2x8x1xf32> to vector<2x8x8xf32>
    %259 = arith.mulf %254, %258 : vector<2x8x8xf32>
    %260 = arith.truncf %259 : vector<2x8x8xf32> to vector<2x8x8xbf16>
    %261 = arith.truncf %240 : vector<2x8x16xf32> to vector<2x8x16xbf16>
    "tpu.trace_start"() <{level = 10 : i32, message = "bqk,bkd->bqd"}> : () -> ()
    %cst_143 = arith.constant dense<0.000000e+00> : vector<2x8x16xf32>
    %262 = tpu.matmul %260, %261, %cst_143 {dimension_numbers = #tpu.dot_dimension_numbers<[2], [1], [1], [2], [0, 0, 0, 1, 1, 2], [0], [0]>} : vector<2x8x8xbf16>, vector<2x8x16xbf16>, vector<2x8x16xf32> -> vector<2x8x16xf32>
    "tpu.trace_stop"() : () -> ()
    %263 = vector.shape_cast %262 : vector<2x8x16xf32> to vector<16x16xf32>
    %264 = vector.extract_strided_slice %234 {offsets = [0, 16], sizes = [16, 16], strides = [1, 1]} : vector<16x128xf32> to vector<16x16xf32>
    %265 = vector.shape_cast %264 : vector<16x16xf32> to vector<2x8x16xf32>
    %266 = vector.extract_strided_slice %234 {offsets = [0, 48], sizes = [16, 16], strides = [1, 1]} : vector<16x128xf32> to vector<16x16xf32>
    %267 = vector.shape_cast %266 : vector<16x16xf32> to vector<2x8x16xf32>
    %268 = vector.extract_strided_slice %234 {offsets = [0, 80], sizes = [16, 16], strides = [1, 1]} : vector<16x128xf32> to vector<16x16xf32>
    %269 = vector.shape_cast %268 : vector<16x16xf32> to vector<2x8x16xf32>
    %270 = arith.truncf %265 : vector<2x8x16xf32> to vector<2x8x16xbf16>
    %271 = arith.truncf %267 : vector<2x8x16xf32> to vector<2x8x16xbf16>
    "tpu.trace_start"() <{level = 10 : i32, message = "bqd,bkd->bqk"}> : () -> ()
    %cst_144 = arith.constant dense<0.000000e+00> : vector<2x8x8xf32>
    %272 = tpu.matmul %270, %271, %cst_144 {dimension_numbers = #tpu.dot_dimension_numbers<[2], [2], [1], [1], [0, 0, 0, 1, 1, 1], [0], [0]>} : vector<2x8x16xbf16>, vector<2x8x16xbf16>, vector<2x8x8xf32> -> vector<2x8x8xf32>
    "tpu.trace_stop"() : () -> ()
    %cst_145 = arith.constant 2.500000e-01 : f32
    %273 = vector.broadcast %cst_145 : f32 to vector<2x8x8xf32>
    %274 = arith.mulf %272, %273 : vector<2x8x8xf32>
    %cst_146 = arith.constant -1.000000e+09 : f32
    %275 = vector.shape_cast %55 : vector<1x8x8xi1> to vector<1x8x8xi1>
    %276 = vector.broadcast %275 : vector<1x8x8xi1> to vector<2x8x8xi1>
    %277 = vector.broadcast %cst_146 : f32 to vector<2x8x8xf32>
    %278 = arith.select %276, %274, %277 : vector<2x8x8xi1>, vector<2x8x8xf32>
    %cst_147 = arith.constant dense<0xFF800000> : vector<2x8xf32>
    %279 = vector.multi_reduction <maximumf>, %278, %cst_147 [2] : vector<2x8x8xf32> to vector<2x8xf32>
    %280 = vector.shape_cast %279 : vector<2x8xf32> to vector<2x8x1xf32>
    %281 = vector.broadcast %280 : vector<2x8x1xf32> to vector<2x8x8xf32>
    %282 = arith.subf %278, %281 : vector<2x8x8xf32>
    %283 = math.exp %282 : vector<2x8x8xf32>
    %cst_148 = arith.constant dense<0.000000e+00> : vector<2x8xf32>
    %284 = vector.multi_reduction <add>, %283, %cst_148 [2] : vector<2x8x8xf32> to vector<2x8xf32>
    %285 = vector.shape_cast %284 : vector<2x8xf32> to vector<2x8x1xf32>
    %286 = tpu.reciprocal %285 {approx = true} : vector<2x8x1xf32> -> vector<2x8x1xf32>
    %287 = vector.broadcast %286 : vector<2x8x1xf32> to vector<2x8x8xf32>
    %288 = arith.mulf %283, %287 : vector<2x8x8xf32>
    %289 = arith.truncf %288 : vector<2x8x8xf32> to vector<2x8x8xbf16>
    %290 = arith.truncf %269 : vector<2x8x16xf32> to vector<2x8x16xbf16>
    "tpu.trace_start"() <{level = 10 : i32, message = "bqk,bkd->bqd"}> : () -> ()
    %cst_149 = arith.constant dense<0.000000e+00> : vector<2x8x16xf32>
    %291 = tpu.matmul %289, %290, %cst_149 {dimension_numbers = #tpu.dot_dimension_numbers<[2], [1], [1], [2], [0, 0, 0, 1, 1, 2], [0], [0]>} : vector<2x8x8xbf16>, vector<2x8x16xbf16>, vector<2x8x16xf32> -> vector<2x8x16xf32>
    "tpu.trace_stop"() : () -> ()
    %292 = vector.shape_cast %291 : vector<2x8x16xf32> to vector<16x16xf32>
    %293 = tpu.concatenate %263, %292 in 1 : vector<16x16xf32>, vector<16x16xf32> -> vector<16x32xf32>
    %294 = arith.truncf %293 : vector<16x32xf32> to vector<16x32xbf16>
    %cst_150 = arith.constant dense<0.000000e+00> : vector<16x32xf32>
    %295 = tpu.matmul %294, %210, %cst_150 {dimension_numbers = #tpu.dot_dimension_numbers<[1], [0], [0], [1], [0, 0, 1, 1], [], []>} : vector<16x32xbf16>, vector<32x32xbf16>, vector<16x32xf32> -> vector<16x32xf32>
    %296 = vector.broadcast %218 : vector<1x32xf32> to vector<16x32xf32>
    %297 = arith.addf %295, %296 : vector<16x32xf32>
    %298 = arith.addf %206, %297 : vector<16x32xf32>
    %cst_151 = arith.constant dense<0.000000e+00> : vector<16xf32>
    %299 = vector.multi_reduction <add>, %298, %cst_151 [1] : vector<16x32xf32> to vector<16xf32>
    %300 = vector.shape_cast %299 : vector<16xf32> to vector<16x1xf32>
    %cst_152 = arith.constant 3.200000e+01 : f32
    %301 = vector.broadcast %cst_152 : f32 to vector<16x1xf32>
    %302 = arith.divf %300, %301 : vector<16x1xf32>
    %303 = vector.broadcast %302 : vector<16x1xf32> to vector<16x32xf32>
    %304 = arith.subf %298, %303 : vector<16x32xf32>
    %305 = vector.broadcast %302 : vector<16x1xf32> to vector<16x32xf32>
    %306 = arith.subf %298, %305 : vector<16x32xf32>
    %307 = arith.mulf %304, %306 : vector<16x32xf32>
    %cst_153 = arith.constant dense<0.000000e+00> : vector<16xf32>
    %308 = vector.multi_reduction <add>, %307, %cst_153 [1] : vector<16x32xf32> to vector<16xf32>
    %309 = vector.shape_cast %308 : vector<16xf32> to vector<16x1xf32>
    %cst_154 = arith.constant 3.200000e+01 : f32
    %310 = vector.broadcast %cst_154 : f32 to vector<16x1xf32>
    %311 = arith.divf %309, %310 : vector<16x1xf32>
    %312 = vector.broadcast %302 : vector<16x1xf32> to vector<16x32xf32>
    %313 = arith.subf %298, %312 : vector<16x32xf32>
    %cst_155 = arith.constant 9.99999974E-6 : f32
    %314 = vector.broadcast %cst_155 : f32 to vector<16x1xf32>
    %315 = arith.addf %311, %314 : vector<16x1xf32>
    %316 = math.rsqrt %315 : vector<16x1xf32>
    %317 = vector.broadcast %316 : vector<16x1xf32> to vector<16x32xf32>
    %318 = arith.mulf %313, %317 : vector<16x32xf32>
    %319 = vector.broadcast %220 : vector<1x32xf32> to vector<16x32xf32>
    %320 = arith.mulf %318, %319 : vector<16x32xf32>
    %321 = vector.broadcast %222 : vector<1x32xf32> to vector<16x32xf32>
    %322 = arith.addf %320, %321 : vector<16x32xf32>
    %323 = arith.truncf %322 : vector<16x32xf32> to vector<16x32xbf16>
    %cst_156 = arith.constant dense<0.000000e+00> : vector<16x128xf32>
    %324 = tpu.matmul %323, %212, %cst_156 {dimension_numbers = #tpu.dot_dimension_numbers<[1], [0], [0], [1], [0, 0, 1, 1], [], []>} : vector<16x32xbf16>, vector<32x128xbf16>, vector<16x128xf32> -> vector<16x128xf32>
    %325 = vector.broadcast %224 : vector<1x128xf32> to vector<16x128xf32>
    %326 = arith.addf %324, %325 : vector<16x128xf32>
    %cst_157 = arith.constant 0.000000e+00 : f32
    %327 = vector.broadcast %cst_157 : f32 to vector<16x128xf32>
    %328 = arith.maximumf %326, %327 : vector<16x128xf32>
    %329 = arith.truncf %328 : vector<16x128xf32> to vector<16x128xbf16>
    %cst_158 = arith.constant dense<0.000000e+00> : vector<16x32xf32>
    %330 = tpu.matmul %329, %214, %cst_158 {dimension_numbers = #tpu.dot_dimension_numbers<[1], [0], [0], [1], [0, 0, 1, 1], [], []>} : vector<16x128xbf16>, vector<128x32xbf16>, vector<16x32xf32> -> vector<16x32xf32>
    %331 = vector.broadcast %226 : vector<1x32xf32> to vector<16x32xf32>
    %332 = arith.addf %330, %331 : vector<16x32xf32>
    %333 = arith.addf %322, %332 : vector<16x32xf32>
    %cst_159 = arith.constant dense<0.000000e+00> : vector<16xf32>
    %334 = vector.multi_reduction <add>, %333, %cst_159 [1] : vector<16x32xf32> to vector<16xf32>
    %335 = vector.shape_cast %334 : vector<16xf32> to vector<16x1xf32>
    %cst_160 = arith.constant 3.200000e+01 : f32
    %336 = vector.broadcast %cst_160 : f32 to vector<16x1xf32>
    %337 = arith.divf %335, %336 : vector<16x1xf32>
    %338 = vector.broadcast %337 : vector<16x1xf32> to vector<16x32xf32>
    %339 = arith.subf %333, %338 : vector<16x32xf32>
    %340 = vector.broadcast %337 : vector<16x1xf32> to vector<16x32xf32>
    %341 = arith.subf %333, %340 : vector<16x32xf32>
    %342 = arith.mulf %339, %341 : vector<16x32xf32>
    %cst_161 = arith.constant dense<0.000000e+00> : vector<16xf32>
    %343 = vector.multi_reduction <add>, %342, %cst_161 [1] : vector<16x32xf32> to vector<16xf32>
    %344 = vector.shape_cast %343 : vector<16xf32> to vector<16x1xf32>
    %cst_162 = arith.constant 3.200000e+01 : f32
    %345 = vector.broadcast %cst_162 : f32 to vector<16x1xf32>
    %346 = arith.divf %344, %345 : vector<16x1xf32>
    %347 = vector.broadcast %337 : vector<16x1xf32> to vector<16x32xf32>
    %348 = arith.subf %333, %347 : vector<16x32xf32>
    %cst_163 = arith.constant 9.99999974E-6 : f32
    %349 = vector.broadcast %cst_163 : f32 to vector<16x1xf32>
    %350 = arith.addf %346, %349 : vector<16x1xf32>
    %351 = math.rsqrt %350 : vector<16x1xf32>
    %352 = vector.broadcast %351 : vector<16x1xf32> to vector<16x32xf32>
    %353 = arith.mulf %348, %352 : vector<16x32xf32>
    %354 = vector.broadcast %228 : vector<1x32xf32> to vector<16x32xf32>
    %355 = arith.mulf %353, %354 : vector<16x32xf32>
    %356 = vector.broadcast %230 : vector<1x32xf32> to vector<16x32xf32>
    %357 = arith.addf %355, %356 : vector<16x32xf32>
    %358 = arith.truncf %357 : vector<16x32xf32> to vector<16x32xbf16>
    %c0_164 = arith.constant 0 : index
    %c0_165 = arith.constant 0 : index
    %359 = vector.load %arg6[%c0_164, %c0_165] : memref<32x128xbf16, #tpu.memory_space<vmem>>, vector<32x128xbf16>
    %cst_166 = arith.constant dense<0.000000e+00> : vector<16x128xf32>
    %360 = tpu.matmul %358, %359, %cst_166 {dimension_numbers = #tpu.dot_dimension_numbers<[1], [0], [0], [1], [0, 0, 1, 1], [], []>} : vector<16x32xbf16>, vector<32x128xbf16>, vector<16x128xf32> -> vector<16x128xf32>
    %c0_167 = arith.constant 0 : index
    %c0_168 = arith.constant 0 : index
    %361 = vector.load %arg7[%c0_167, %c0_168] : memref<1x128xf32, #tpu.memory_space<vmem>>, vector<1x128xf32>
    %362 = vector.broadcast %361 : vector<1x128xf32> to vector<16x128xf32>
    %363 = arith.addf %360, %362 : vector<16x128xf32>
    %c0_169 = arith.constant 0 : index
    %c0_170 = arith.constant 0 : index
    %364 = vector.load %arg8[%c0_169, %c0_170] : memref<16x128xf32, #tpu.memory_space<vmem>>, vector<16x128xf32>
    tpu.vector_store %arg8[%c0_169, %c0_170], %363 {strides = array<i32>} : memref<16x128xf32, #tpu.memory_space<vmem>>, vector<16x128xf32>,
    return
  }
  func.func @transform_0(%arg0: i32, %arg1: memref<2x8xi32, #tpu.memory_space<smem>>) -> (i32, i32) {
    %c0_i32 = arith.constant 0 : i32
    %c0_i32_0 = arith.constant 0 : i32
    %c0_i32_1 = arith.constant 0 : i32
    return %c0_i32, %c0_i32_0 : i32, i32
  }
  func.func @transform_1(%arg0: i32, %arg1: memref<2x8xi32, #tpu.memory_space<smem>>) -> (i32, i32) {
    %c0_i32 = arith.constant 0 : i32
    %c0_i32_0 = arith.constant 0 : i32
    %c0_i32_1 = arith.constant 0 : i32
    return %c0_i32, %c0_i32_0 : i32, i32
  }
  func.func @transform_2(%arg0: i32, %arg1: memref<2x8xi32, #tpu.memory_space<smem>>) -> (i32, i32, i32) {
    %c0_i32 = arith.constant 0 : i32
    %c0_i32_0 = arith.constant 0 : i32
    %c0_i32_1 = arith.constant 0 : i32
    %c0_i32_2 = arith.constant 0 : i32
    return %c0_i32, %c0_i32_0, %c0_i32_1 : i32, i32, i32
  }
  func.func @transform_3(%arg0: i32, %arg1: memref<2x8xi32, #tpu.memory_space<smem>>) -> (i32, i32, i32) {
    %c0_i32 = arith.constant 0 : i32
    %c0_i32_0 = arith.constant 0 : i32
    %c0_i32_1 = arith.constant 0 : i32
    %c0_i32_2 = arith.constant 0 : i32
    return %c0_i32, %c0_i32_0, %c0_i32_1 : i32, i32, i32
  }
  func.func @transform_4(%arg0: i32, %arg1: memref<2x8xi32, #tpu.memory_space<smem>>) -> (i32, i32) {
    %c0_i32 = arith.constant 0 : i32
    %c0_i32_0 = arith.constant 0 : i32
    %c0_i32_1 = arith.constant 0 : i32
    return %c0_i32, %c0_i32_0 : i32, i32
  }
  func.func @transform_5(%arg0: i32, %arg1: memref<2x8xi32, #tpu.memory_space<smem>>) -> (i32, i32) {
    %c0_i32 = arith.constant 0 : i32
    %c0_i32_0 = arith.constant 0 : i32
    %c0_i32_1 = arith.constant 0 : i32
    return %c0_i32, %c0_i32_0 : i32, i32
  }
  func.func @transform_6(%arg0: i32, %arg1: memref<2x8xi32, #tpu.memory_space<smem>>) -> (i32, i32) {
    %c0_i32 = arith.constant 0 : i32
    %c0_i32_0 = arith.constant 0 : i32
    %c0_i32_1 = arith.constant 0 : i32
    return %c0_i32, %c0_i32_0 : i32, i32
  }
}

</mosaic_0001>

<llo_original>
// kernel: _gpt_forward_impl.1
$region0: #{_gpt_forward_impl.1}
  #allocation0 [shape = 'u32[]', space=smem, size = 0x4, offset = 0x4, fixed_abs, tag = 'smem constant byte address 0x4 - core index']
  #allocation1 [shape = 'u32[144,128]{1,0:T(1,128)}', space=vmem, size = 0x12000, scoped, tag = 'internal scratch']
  #allocation2 [shape = 's32[1]{0}', space=sflag, size = 0x4, scoped, tag = 'scoped memory for _gpt_forward_impl.1']
  #allocation3 [shape = 'u8[1024]{0}', space=smem, size = 0x400, scoped, tag = 'prefetched SMEM operand 0']
  %s0 = inlined_call_operand.vmem [shape: s32[2,8], index: 0, kind: input, shape index: {}]
  %s1 = inlined_call_operand.vmem [shape: f32[96,32], index: 1, kind: input, shape index: {}]
  %s2 = inlined_call_operand.vmem [shape: f32[8,32], index: 2, kind: input, shape index: {}]
  %s3 = inlined_call_operand.hbm [shape: bf16[2,224,128], index: 3, kind: input, shape index: {}]
  %s4 = inlined_call_operand.vmem [shape: f32[2,8,128], index: 4, kind: input, shape index: {}]
  %s5 = inlined_call_operand.vmem [shape: bf16[32,128], index: 5, kind: input, shape index: {}]
  %s6 = inlined_call_operand.vmem [shape: f32[1,128], index: 6, kind: input, shape index: {}]
  %s7 = inlined_call_operand.hbm [shape: f32[16,128], index: 7, kind: output, shape index: {}]
  %s8 = sld [smem:[#allocation0]]
  $region38: #{_gpt_forward_impl.1} parent=0
    _
  %s10 = ssub.s32 1, %s8
  %s11 = scalar_select 0, %s10, %s8
  %s12 = sshll.u32 %s0, 4
  %s13 = int_to_ptr.vmem [resolvable:$true] %s12
  %15 = dma.vmem_to_smem %s13, 32, [#allocation3], [#allocation2]
  %16 = dma.done [#allocation2], 32
  %17 = sfence
  $region1: #{_gpt_forward_impl.1} parent=0
    #allocation4 [shape = 'u8[114688]{0}', space=vmem, size = 0x1c000, scoped, tag = 'input window, operand 3, single buffered']
    #allocation5 [shape = 's32[1]{0}', space=sflag, size = 0x4, scoped, tag = 'scoped memory for _gpt_forward_impl.1']
    #allocation6 [shape = 's32[1]{0}', space=sflag, size = 0x4, scoped, tag = 'scoped memory for _gpt_forward_impl.1']
    #allocation7 [shape = 'u8[8192]{0}', space=vmem, size = 0x2000, scoped, tag = 'output window, operand 0, single buffered']
    %18 = vsyncpa [#allocation5], 0
    %19 = vsyncpa [#allocation6], 0
    // Predicated region
    $region2: #{_gpt_forward_impl.1} parent=1 // pred_check
      _
    $region3: #{_gpt_forward_impl.1} parent=1 // pred_check_branch
      %21 = sbr.rel (0) target = $region5
    $region4: #{_gpt_forward_impl.1} parent=1 // pred_region
      _
    $region5: #{_gpt_forward_impl.1} parent=1 // pred_fallthru
      _
    // Predicated region
    $region6: #{_gpt_forward_impl.1} parent=1 // pred_check
      _
    $region7: #{_gpt_forward_impl.1} parent=1 // pred_check_branch
      %23 = sbr.rel (0) target = $region9
    $region8: #{_gpt_forward_impl.1} parent=1 // pred_region
      _
    $region9: #{_gpt_forward_impl.1} parent=1 // pred_fallthru
      _
    // Predicated region
    $region10: #{_gpt_forward_impl.1} parent=1 // pred_check
      _
    $region11: #{_gpt_forward_impl.1} parent=1 // pred_check_branch
      %25 = sbr.rel (0) target = $region13
    $region12: #{_gpt_forward_impl.1} parent=1 // pred_region
      %s27 = ssub.s32 3584, 3584
      %28 = vsyncadd [#allocation5], %s27
      %s29 = sshll.u32 [#allocation4], 4
      %s30 = int_to_ptr.vmem [resolvable:$true] %s29
      %35 = dma.hbm_to_vmem [thread:$0]  %s3, 3584, %s30, [#allocation5], 64, 64, 4
    $region13: #{_gpt_forward_impl.1} parent=1 // pred_fallthru
      _
    // Predicated region
    $region14: #{_gpt_forward_impl.1} parent=1 // pred_check
      _
    $region15: #{_gpt_forward_impl.1} parent=1 // pred_check_branch
      %37 = sbr.rel (0) target = $region17
    $region16: #{_gpt_forward_impl.1} parent=1 // pred_region
      _
    $region17: #{_gpt_forward_impl.1} parent=1 // pred_fallthru
      _
    // Predicated region
    $region18: #{_gpt_forward_impl.1} parent=1 // pred_check
      _
    $region19: #{_gpt_forward_impl.1} parent=1 // pred_check_branch
      %39 = sbr.rel (0) target = $region21
    $region20: #{_gpt_forward_impl.1} parent=1 // pred_region
      _
    $region21: #{_gpt_forward_impl.1} parent=1 // pred_fallthru
      _
    // Predicated region
    $region22: #{_gpt_forward_impl.1} parent=1 // pred_check
      _
    $region23: #{_gpt_forward_impl.1} parent=1 // pred_check_branch
      %41 = sbr.rel (0) target = $region25
    $region24: #{_gpt_forward_impl.1} parent=1 // pred_region
      _
    $region25: #{_gpt_forward_impl.1} parent=1 // pred_fallthru
      _
    // Predicated region
    $region26: #{_gpt_forward_impl.1} parent=1 // pred_check
      _
    $region27: #{_gpt_forward_impl.1} parent=1 // pred_check_branch
      %43 = sbr.rel (0) target = $region29
    $region28: #{_gpt_forward_impl.1} parent=1 // pred_region
      %44 = dma.done [#allocation5], 3584
    $region29: #{_gpt_forward_impl.1} parent=1 // pred_fallthru
      _
    %s46 = sld [smem:[#allocation3]]
    %s47 = scalar_lea.vmem %s1, %s46
    %v48 = vld [vmem:[%s47] sm:$0x1]
    %s49 = sld [smem:[#allocation3 + $0x1]]
    %s50 = scalar_lea.vmem %s1, %s49
    %v51 = vld [vmem:[%s50] sm:$0x1]
    %s52 = sld [smem:[#allocation3 + $0x2]]
    %s53 = scalar_lea.vmem %s1, %s52
    %v54 = vld [vmem:[%s53] sm:$0x1]
    %s55 = sld [smem:[#allocation3 + $0x3]]
    %s56 = scalar_lea.vmem %s1, %s55
    %v57 = vld [vmem:[%s56] sm:$0x1]
    %s58 = sld [smem:[#allocation3 + $0x4]]
    %s59 = scalar_lea.vmem %s1, %s58
    %v60 = vld [vmem:[%s59] sm:$0x1]
    %s61 = sld [smem:[#allocation3 + $0x5]]
    %s62 = scalar_lea.vmem %s1, %s61
    %v63 = vld [vmem:[%s62] sm:$0x1]
    %s64 = sld [smem:[#allocation3 + $0x6]]
    %s65 = scalar_lea.vmem %s1, %s64
    %v66 = vld [vmem:[%s65] sm:$0x1]
    %s67 = sld [smem:[#allocation3 + $0x7]]
    %s68 = scalar_lea.vmem %s1, %s67
    %v69 = vld [vmem:[%s68] sm:$0x1]
    %s70 = sld [smem:[#allocation3 + $0x80]]
    %s71 = scalar_lea.vmem %s1, %s70
    %v72 = vld [vmem:[%s71] sm:$0x1]
    %s73 = sld [smem:[#allocation3 + $0x81]]
    %s74 = scalar_lea.vmem %s1, %s73
    %v75 = vld [vmem:[%s74] sm:$0x1]
    %s76 = sld [smem:[#allocation3 + $0x82]]
    %s77 = scalar_lea.vmem %s1, %s76
    %v78 = vld [vmem:[%s77] sm:$0x1]
    %s79 = sld [smem:[#allocation3 + $0x83]]
    %s80 = scalar_lea.vmem %s1, %s79
    %v81 = vld [vmem:[%s80] sm:$0x1]
    %s82 = sld [smem:[#allocation3 + $0x84]]
    %s83 = scalar_lea.vmem %s1, %s82
    %v84 = vld [vmem:[%s83] sm:$0x1]
    %s85 = sld [smem:[#allocation3 + $0x85]]
    %s86 = scalar_lea.vmem %s1, %s85
    %v87 = vld [vmem:[%s86] sm:$0x1]
    %s88 = sld [smem:[#allocation3 + $0x86]]
    %s89 = scalar_lea.vmem %s1, %s88
    %v90 = vld [vmem:[%s89] sm:$0x1]
    %s91 = sld [smem:[#allocation3 + $0x87]]
    %s92 = scalar_lea.vmem %s1, %s91
    %v93 = vld [vmem:[%s92] sm:$0x1]
    %v95 = vrot.slane %v51, 7
    %v98 = vrot.slane %v54, 6
    %v101 = vrot.slane %v57, 5
    %v104 = vrot.slane %v60, 4
    %v107 = vrot.slane %v63, 3
    %v110 = vrot.slane %v66, 2
    %v113 = vrot.slane %v69, 1
    %v116 = vrot.slane %v75, 7
    %v119 = vrot.slane %v78, 6
    %v122 = vrot.slane %v81, 5
    %v125 = vrot.slane %v84, 4
    %v128 = vrot.slane %v87, 3
    %v131 = vrot.slane %v90, 2
    %v134 = vrot.slane %v93, 1
    %vm136 = vcmask 1040384
    %v137 = vsel %vm136, %v48, %v95
    %vm138 = vcmask 1041408
    %v139 = vsel %vm138, %v137, %v98
    %vm140 = vcmask 1042432
    %v141 = vsel %vm140, %v139, %v101
    %vm142 = vcmask 1043456
    %v143 = vsel %vm142, %v141, %v104
    %vm144 = vcmask 1044480
    %v145 = vsel %vm144, %v143, %v107
    %vm146 = vcmask 1045504
    %v147 = vsel %vm146, %v145, %v110
    %vm148 = vcmask 1046528
    %v149 = vsel %vm148, %v147, %v113
    %v150 = vsel %vm136, %v72, %v116
    %v151 = vsel %vm138, %v150, %v119
    %v152 = vsel %vm140, %v151, %v122
    %v153 = vsel %vm142, %v152, %v125
    %v154 = vsel %vm144, %v153, %v128
    %v155 = vsel %vm146, %v154, %v131
    %v156 = vsel %vm148, %v155, %v134
    %v157 = vld [vmem:[%s2] sm:$0xff]
    %v158 = vadd.f32 %v149, %v157
    %v159 = vadd.f32 %v156, %v157
    %v160 = vlaneseq
    %v161 = vshrl.u32 %v160, 7
    %v162 = vlaneseq
    %v163 = vand.u32 %v162, 127
    %vm164 = vcmp.le.s32.totalorder %v163, %v161
    %v165 = vld [vmem:[#allocation4] sm:$0xf]
    %v166 = vld [vmem:[#allocation4 + $0x4] sm:$0xf]
    %v167 = vld [vmem:[#allocation4 + $0x8] sm:$0xf]
    %v168 = vld [vmem:[#allocation4 + $0xc] sm:$0xf]
    %v169 = vld [vmem:[#allocation4 + $0x10] sm:$0xf]
    %v170 = vld [vmem:[#allocation4 + $0x14] sm:$0xf]
    %v171 = vld [vmem:[#allocation4 + $0x18] sm:$0xf]
    %v172 = vld [vmem:[#allocation4 + $0x1c] sm:$0xf]
    %v173 = vld [vmem:[#allocation4 + $0x20] sm:$0xf]
    %v174 = vld [vmem:[#allocation4 + $0x24] sm:$0xf]
    %v175 = vld [vmem:[#allocation4 + $0x28] sm:$0xf]
    %v176 = vld [vmem:[#allocation4 + $0x2c] sm:$0xf]
    %v177 = vld [vmem:[#allocation4 + $0x30] sm:$0xf]
    %v178 = vld [vmem:[#allocation4 + $0x34] sm:$0xf]
    %v179 = vld [vmem:[#allocation4 + $0x38] sm:$0xf]
    %v180 = vld [vmem:[#allocation4 + $0x3c] sm:$0xf]
    %v181 = vld [vmem:[#allocation4 + $0x40] sm:$0xf]
    %v182 = vld [vmem:[#allocation4 + $0x44] sm:$0xf]
    %v183 = vld [vmem:[#allocation4 + $0x48] sm:$0xf]
    %v184 = vld [vmem:[#allocation4 + $0x4c] sm:$0xf]
    %v185 = vld [vmem:[#allocation4 + $0x50] sm:$0xf]
    %v186 = vld [vmem:[#allocation4 + $0x54] sm:$0xf]
    %v187 = vld [vmem:[#allocation4 + $0x58] sm:$0xf]
    %v188 = vld [vmem:[#allocation4 + $0x5c] sm:$0xf]
    %v189 = vld [vmem:[#allocation4 + $0x60] sm:$0xf]
    %v190 = vld [vmem:[#allocation4 + $0x64] sm:$0xf]
    %v191 = vld [vmem:[#allocation4 + $0x68] sm:$0xf]
    %v192 = vld [vmem:[#allocation4 + $0x6c] sm:$0xf]
    %v193 = vld [vmem:[%s4] sm:$0x1]
    %v194 = vld [vmem:[%s4 + $0x1] sm:$0x1]
    %v195 = vld [vmem:[%s4 + $0x2] sm:$0x1]
    %v196 = vld [vmem:[%s4 + $0x3] sm:$0x1]
    %v197 = vld [vmem:[%s4 + $0x4] sm:$0x1]
    %v198 = vld [vmem:[%s4 + $0x5] sm:$0x1]
    %v199 = vld [vmem:[%s4 + $0x6] sm:$0x1]
    %v200 = vld [vmem:[%s4 + $0x7] sm:$0x1]
    %v201 = vpack.c.bf16 %v159, %v158
    %v202 = vlaneseq
    %v203 = vshrl.u32 %v202, 7
    %v204 = vsub.s32 0, %v203
    %v205 = vrot.slane %v193, %v204
    %v210 = vunpack.c.l.b16 %v165
    %v211 = vunpack.c.l.b16 %v166
    %v212 = vunpack.c.l.b16 %v167
    %v213 = vunpack.c.l.b16 %v168
    %v214 = vpack.c.b16 %v211, %v210
    %v215 = vpack.c.b16 %v213, %v212
    %vm218 = vcmask 261120
    %v220 = vsel %vm218, %v201, 0
    %222 = vmatprep.subr.bf16.mxu0 0
    %223 = vmatpush1.bf16.msra.mxu0 %v214
    %224 = vmatprep.subr.bf16.mxu0 0
    %225 = vmatpush1.bf16.msra.mxu0 %v215
    %226 = vmatprep.subr.bf16.mxu0 0
    %227 = vmatpush1.bf16.msra.mxu0 0
    %228 = vmatprep.subr.bf16.mxu0 0
    %229 = vmatpush1.bf16.msra.mxu0 0
    %230 = vmatprep.subr.bf16.mxu0 0
    %231 = vmatpush1.bf16.msra.mxu0 0
    %232 = vmatprep.subr.bf16.mxu0 0
    %233 = vmatpush1.bf16.msra.mxu0 0
    %234 = vmatprep.subr.bf16.mxu0 0
    %235 = vmatpush1.bf16.msra.mxu0 0
    %236 = vmatprep.subr.bf16.mxu0 0
    %237 = vmatpush1.bf16.msra.mxu0 0
    %238 = vmatprep.subr.bf16.mxu0 0
    %239 = vmatpush1.bf16.msra.mxu0 0
    %240 = vmatprep.subr.bf16.mxu0 0
    %241 = vmatpush1.bf16.msra.mxu0 0
    %242 = vmatprep.subr.bf16.mxu0 0
    %243 = vmatpush1.bf16.msra.mxu0 0
    %244 = vmatprep.subr.bf16.mxu0 0
    %245 = vmatpush1.bf16.msra.mxu0 0
    %246 = vmatprep.subr.bf16.mxu0 0
    %247 = vmatpush1.bf16.msra.mxu0 0
    %248 = vmatprep.subr.bf16.mxu0 0
    %249 = vmatpush1.bf16.msra.mxu0 0
    %250 = vmatprep.subr.bf16.mxu0 0
    %251 = vmatpush1.bf16.msra.mxu0 0
    %252 = vmatprep.subr.bf16.mxu0 0
    %253 = vmatpush1.bf16.msra.mxu0 0
    %254 = vmatprep.mubr.bf16.mxu0 0
    %255 = vmatmul.mubr.bf16.gmra.mrb[0].mxu0 %v220
    %v256 = vpop.f32.mrb[0].mxu0
    %v257 = vadd.f32 %v205, %v256
    %v258 = vpop.f32.mrb[0].mxu0
    %v259 = vpop.f32.mrb[0].mxu0
    %v260 = vadd.f32 %v205, %v259
    %v261 = vpop.f32.mrb[0].mxu0
    %262 = vdwg.mxu0
    %v263 = vpack.c.bf16 %v257, %v257
    %v264 = vpack.c.bf16 %v260, %v260
    %266 = vrot.lane.b32.xlu0 %v263, 96
    %v267 = vpop.permute.xlu0 %266
    %vm268 = vcmask 130048
    %v270 = vsel %vm268, %v263, 0
    %v273 = vsel %vm268, %v267, 0
    %275 = vmatprep.subr.bf16.mxu0 0
    %276 = vmatpush1.bf16.xpose.msra.mxu0 %v273
    %277 = vmatprep.subr.bf16.mxu0 0
    %278 = vmatpush1.bf16.xpose.msra.mxu0 0
    %279 = vmatprep.subr.bf16.mxu0 0
    %280 = vmatpush1.bf16.xpose.msra.mxu0 0
    %281 = vmatprep.subr.bf16.mxu0 0
    %282 = vmatpush1.bf16.xpose.msra.mxu0 0
    %283 = vmatprep.subr.bf16.mxu0 0
    %284 = vmatpush1.bf16.xpose.msra.mxu0 0
    %285 = vmatprep.subr.bf16.mxu0 0
    %286 = vmatpush1.bf16.xpose.msra.mxu0 0
    %287 = vmatprep.subr.bf16.mxu0 0
    %288 = vmatpush1.bf16.xpose.msra.mxu0 0
    %289 = vmatprep.subr.bf16.mxu0 0
    %290 = vmatpush1.bf16.xpose.msra.mxu0 0
    %291 = vmatprep.subr.bf16.mxu0 0
    %292 = vmatpush1.bf16.xpose.msra.mxu0 0
    %293 = vmatprep.subr.bf16.mxu0 0
    %294 = vmatpush1.bf16.xpose.msra.mxu0 0
    %295 = vmatprep.subr.bf16.mxu0 0
    %296 = vmatpush1.bf16.xpose.msra.mxu0 0
    %297 = vmatprep.subr.bf16.mxu0 0
    %298 = vmatpush1.bf16.xpose.msra.mxu0 0
    %299 = vmatprep.subr.bf16.mxu0 0
    %300 = vmatpush1.bf16.xpose.msra.mxu0 0
    %301 = vmatprep.subr.bf16.mxu0 0
    %302 = vmatpush1.bf16.xpose.msra.mxu0 0
    %303 = vmatprep.subr.bf16.mxu0 0
    %304 = vmatpush1.bf16.xpose.msra.mxu0 0
    %305 = vmatprep.subr.bf16.mxu0 0
    %306 = vmatpush1.bf16.xpose.msra.mxu0 0
    %307 = vmatprep.mubr.bf16.mxu0 0
    %308 = vmatmul.mubr.bf16.gmra.mrb[0].mxu0 %v270
    %v309 = vpop.f32.mrb[0].mxu0
    %v310 = vadd.f32 0.0, %v309
    %v311 = vpop.f32.mrb[0].mxu0
    %v312 = vpop.f32.mrb[0].mxu0
    %v313 = vpop.f32.mrb[0].mxu0
    %314 = vdwg.mxu0
    %316 = vrot.lane.b32.xlu0 %v264, 96
    %v317 = vpop.permute.xlu0 %316
    %v319 = vsel %vm268, %v264, 0
    %v322 = vsel %vm268, %v317, 0
    %324 = vmatprep.subr.bf16.mxu0 0
    %325 = vmatpush1.bf16.xpose.msra.mxu0 %v322
    %326 = vmatprep.subr.bf16.mxu0 0
    %327 = vmatpush1.bf16.xpose.msra.mxu0 0
    %328 = vmatprep.subr.bf16.mxu0 0
    %329 = vmatpush1.bf16.xpose.msra.mxu0 0
    %330 = vmatprep.subr.bf16.mxu0 0
    %331 = vmatpush1.bf16.xpose.msra.mxu0 0
    %332 = vmatprep.subr.bf16.mxu0 0
    %333 = vmatpush1.bf16.xpose.msra.mxu0 0
    %334 = vmatprep.subr.bf16.mxu0 0
    %335 = vmatpush1.bf16.xpose.msra.mxu0 0
    %336 = vmatprep.subr.bf16.mxu0 0
    %337 = vmatpush1.bf16.xpose.msra.mxu0 0
    %338 = vmatprep.subr.bf16.mxu0 0
    %339 = vmatpush1.bf16.xpose.msra.mxu0 0
    %340 = vmatprep.subr.bf16.mxu0 0
    %341 = vmatpush1.bf16.xpose.msra.mxu0 0
    %342 = vmatprep.subr.bf16.mxu0 0
    %343 = vmatpush1.bf16.xpose.msra.mxu0 0
    %344 = vmatprep.subr.bf16.mxu0 0
    %345 = vmatpush1.bf16.xpose.msra.mxu0 0
    %346 = vmatprep.subr.bf16.mxu0 0
    %347 = vmatpush1.bf16.xpose.msra.mxu0 0
    %348 = vmatprep.subr.bf16.mxu0 0
    %349 = vmatpush1.bf16.xpose.msra.mxu0 0
    %350 = vmatprep.subr.bf16.mxu0 0
    %351 = vmatpush1.bf16.xpose.msra.mxu0 0
    %352 = vmatprep.subr.bf16.mxu0 0
    %353 = vmatpush1.bf16.xpose.msra.mxu0 0
    %354 = vmatprep.subr.bf16.mxu0 0
    %355 = vmatpush1.bf16.xpose.msra.mxu0 0
    %356 = vmatprep.mubr.bf16.mxu0 0
    %357 = vmatmul.mubr.bf16.gmra.mrb[0].mxu0 %v319
    %v358 = vpop.f32.mrb[0].mxu0
    %v359 = vadd.f32 0.0, %v358
    %v360 = vpop.f32.mrb[0].mxu0
    %v361 = vpop.f32.mrb[0].mxu0
    %v362 = vpop.f32.mrb[0].mxu0
    %363 = vdwg.mxu0
    %v364 = vmul.f32 %v310, 0.25
    %v365 = vmul.f32 %v359, 0.25
    %v366 = vsel %vm164, 1, 0
    %vm367 = vcmp.eq.s32.totalorder %v366, 1
    %v368 = vsel %vm367, %v364, -1e+09
    %v369 = vsel %vm367, %v365, -1e+09
    %vm370 = vcmask 64512
    %v371 = vsel %vm370, %v368, -inf
    %372 = vmax.xlane.f32.xlu0 %v371
    %v373 = vpop.xlane.xlu0 %372
    %v374 = vsel %vm370, %v369, -inf
    %375 = vmax.xlane.f32.xlu0 %v374
    %v376 = vpop.xlane.xlu0 %375
    %v377 = vsub.f32 %v368, %v373
    %v378 = vsub.f32 %v369, %v376
    %v379 = vmul.f32 %v377, 1.442695
    %v380 = vpow.pop %v379
    %v381 = vmul.f32 %v378, 1.442695
    %v382 = vpow.pop %v381
    %v383 = vsel %vm370, %v380, 0.0
    %384 = vadd.xlane.f32.xlu0 %v383
    %v385 = vpop.xlane.xlu0 %384
    %v386 = vsel %vm370, %v382, 0.0
    %387 = vadd.xlane.f32.xlu0 %v386
    %v388 = vpop.xlane.xlu0 %387
    %v389 = vrcp.pop %v385
    %v390 = vrcp.pop %v388
    %v391 = vmul.f32 %v380, %v389
    %v392 = vmul.f32 %v382, %v390
    %v393 = vpack.c.bf16 %v391, %v391
    %v394 = vpack.c.bf16 %v392, %v392
    %395 = vrot.lane.b32.xlu0 %v263, 64
    %v396 = vpop.permute.xlu0 %395
    %v398 = vsel %vm370, %v393, 0
    %v401 = vsel %vm142, %v396, 0
    %403 = vmatprep.subr.bf16.mxu0 0
    %404 = vmatpush1.bf16.msra.mxu0 %v401
    %405 = vmatprep.subr.bf16.mxu0 0
    %406 = vmatpush1.bf16.msra.mxu0 0
    %407 = vmatprep.subr.bf16.mxu0 0
    %408 = vmatpush1.bf16.msra.mxu0 0
    %409 = vmatprep.subr.bf16.mxu0 0
    %410 = vmatpush1.bf16.msra.mxu0 0
    %411 = vmatprep.subr.bf16.mxu0 0
    %412 = vmatpush1.bf16.msra.mxu0 0
    %413 = vmatprep.subr.bf16.mxu0 0
    %414 = vmatpush1.bf16.msra.mxu0 0
    %415 = vmatprep.subr.bf16.mxu0 0
    %416 = vmatpush1.bf16.msra.mxu0 0
    %417 = vmatprep.subr.bf16.mxu0 0
    %418 = vmatpush1.bf16.msra.mxu0 0
    %419 = vmatprep.subr.bf16.mxu0 0
    %420 = vmatpush1.bf16.msra.mxu0 0
    %421 = vmatprep.subr.bf16.mxu0 0
    %422 = vmatpush1.bf16.msra.mxu0 0
    %423 = vmatprep.subr.bf16.mxu0 0
    %424 = vmatpush1.bf16.msra.mxu0 0
    %425 = vmatprep.subr.bf16.mxu0 0
    %426 = vmatpush1.bf16.msra.mxu0 0
    %427 = vmatprep.subr.bf16.mxu0 0
    %428 = vmatpush1.bf16.msra.mxu0 0
    %429 = vmatprep.subr.bf16.mxu0 0
    %430 = vmatpush1.bf16.msra.mxu0 0
    %431 = vmatprep.subr.bf16.mxu0 0
    %432 = vmatpush1.bf16.msra.mxu0 0
    %433 = vmatprep.subr.bf16.mxu0 0
    %434 = vmatpush1.bf16.msra.mxu0 0
    %435 = vmatprep.mubr.bf16.mxu0 0
    %436 = vmatmul.mubr.bf16.gmra.mrb[0].mxu0 %v398
    %v437 = vpop.f32.mrb[0].mxu0
    %v438 = vadd.f32 0.0, %v437
    %v439 = vpop.f32.mrb[0].mxu0
    %v440 = vpop.f32.mrb[0].mxu0
    %v441 = vpop.f32.mrb[0].mxu0
    %442 = vdwg.mxu0
    %443 = vrot.lane.b32.xlu0 %v264, 64
    %v444 = vpop.permute.xlu0 %443
    %v446 = vsel %vm370, %v394, 0
    %v449 = vsel %vm142, %v444, 0
    %451 = vmatprep.subr.bf16.mxu0 0
    %452 = vmatpush1.bf16.msra.mxu0 %v449
    %453 = vmatprep.subr.bf16.mxu0 0
    %454 = vmatpush1.bf16.msra.mxu0 0
    %455 = vmatprep.subr.bf16.mxu0 0
    %456 = vmatpush1.bf16.msra.mxu0 0
    %457 = vmatprep.subr.bf16.mxu0 0
    %458 = vmatpush1.bf16.msra.mxu0 0
    %459 = vmatprep.subr.bf16.mxu0 0
    %460 = vmatpush1.bf16.msra.mxu0 0
    %461 = vmatprep.subr.bf16.mxu0 0
    %462 = vmatpush1.bf16.msra.mxu0 0
    %463 = vmatprep.subr.bf16.mxu0 0
    %464 = vmatpush1.bf16.msra.mxu0 0
    %465 = vmatprep.subr.bf16.mxu0 0
    %466 = vmatpush1.bf16.msra.mxu0 0
    %467 = vmatprep.subr.bf16.mxu0 0
    %468 = vmatpush1.bf16.msra.mxu0 0
    %469 = vmatprep.subr.bf16.mxu0 0
    %470 = vmatpush1.bf16.msra.mxu0 0
    %471 = vmatprep.subr.bf16.mxu0 0
    %472 = vmatpush1.bf16.msra.mxu0 0
    %473 = vmatprep.subr.bf16.mxu0 0
    %474 = vmatpush1.bf16.msra.mxu0 0
    %475 = vmatprep.subr.bf16.mxu0 0
    %476 = vmatpush1.bf16.msra.mxu0 0
    %477 = vmatprep.subr.bf16.mxu0 0
    %478 = vmatpush1.bf16.msra.mxu0 0
    %479 = vmatprep.subr.bf16.mxu0 0
    %480 = vmatpush1.bf16.msra.mxu0 0
    %481 = vmatprep.subr.bf16.mxu0 0
    %482 = vmatpush1.bf16.msra.mxu0 0
    %483 = vmatprep.mubr.bf16.mxu0 0
    %484 = vmatmul.mubr.bf16.gmra.mrb[0].mxu0 %v446
    %v485 = vpop.f32.mrb[0].mxu0
    %v486 = vadd.f32 0.0, %v485
    %v487 = vpop.f32.mrb[0].mxu0
    %v488 = vpop.f32.mrb[0].mxu0
    %v489 = vpop.f32.mrb[0].mxu0
    %490 = vdwg.mxu0
    %491 = vrot.lane.b32.xlu0 %v263, 112
    %v492 = vpop.permute.xlu0 %491
    %493 = vrot.lane.b32.xlu0 %v263, 80
    %v494 = vpop.permute.xlu0 %493
    %v496 = vsel %vm268, %v492, 0
    %v499 = vsel %vm268, %v494, 0
    %501 = vmatprep.subr.bf16.mxu0 0
    %502 = vmatpush1.bf16.xpose.msra.mxu0 %v499
    %503 = vmatprep.subr.bf16.mxu0 0
    %504 = vmatpush1.bf16.xpose.msra.mxu0 0
    %505 = vmatprep.subr.bf16.mxu0 0
    %506 = vmatpush1.bf16.xpose.msra.mxu0 0
    %507 = vmatprep.subr.bf16.mxu0 0
    %508 = vmatpush1.bf16.xpose.msra.mxu0 0
    %509 = vmatprep.subr.bf16.mxu0 0
    %510 = vmatpush1.bf16.xpose.msra.mxu0 0
    %511 = vmatprep.subr.bf16.mxu0 0
    %512 = vmatpush1.bf16.xpose.msra.mxu0 0
    %513 = vmatprep.subr.bf16.mxu0 0
    %514 = vmatpush1.bf16.xpose.msra.mxu0 0
    %515 = vmatprep.subr.bf16.mxu0 0
    %516 = vmatpush1.bf16.xpose.msra.mxu0 0
    %517 = vmatprep.subr.bf16.mxu0 0
    %518 = vmatpush1.bf16.xpose.msra.mxu0 0
    %519 = vmatprep.subr.bf16.mxu0 0
    %520 = vmatpush1.bf16.xpose.msra.mxu0 0
    %521 = vmatprep.subr.bf16.mxu0 0
    %522 = vmatpush1.bf16.xpose.msra.mxu0 0
    %523 = vmatprep.subr.bf16.mxu0 0
    %524 = vmatpush1.bf16.xpose.msra.mxu0 0
    %525 = vmatprep.subr.bf16.mxu0 0
    %526 = vmatpush1.bf16.xpose.msra.mxu0 0
    %527 = vmatprep.subr.bf16.mxu0 0
    %528 = vmatpush1.bf16.xpose.msra.mxu0 0
    %529 = vmatprep.subr.bf16.mxu0 0
    %530 = vmatpush1.bf16.xpose.msra.mxu0 0
    %531 = vmatprep.subr.bf16.mxu0 0
    %532 = vmatpush1.bf16.xpose.msra.mxu0 0
    %533 = vmatprep.mubr.bf16.mxu0 0
    %534 = vmatmul.mubr.bf16.gmra.mrb[0].mxu0 %v496
    %v535 = vpop.f32.mrb[0].mxu0
    %v536 = vadd.f32 0.0, %v535
    %v537 = vpop.f32.mrb[0].mxu0
    %v538 = vpop.f32.mrb[0].mxu0
    %v539 = vpop.f32.mrb[0].mxu0
    %540 = vdwg.mxu0
    %541 = vrot.lane.b32.xlu0 %v264, 112
    %v542 = vpop.permute.xlu0 %541
    %543 = vrot.lane.b32.xlu0 %v264, 80
    %v544 = vpop.permute.xlu0 %543
    %v546 = vsel %vm268, %v542, 0
    %v549 = vsel %vm268, %v544, 0
    %551 = vmatprep.subr.bf16.mxu0 0
    %552 = vmatpush1.bf16.xpose.msra.mxu0 %v549
    %553 = vmatprep.subr.bf16.mxu0 0
    %554 = vmatpush1.bf16.xpose.msra.mxu0 0
    %555 = vmatprep.subr.bf16.mxu0 0
    %556 = vmatpush1.bf16.xpose.msra.mxu0 0
    %557 = vmatprep.subr.bf16.mxu0 0
    %558 = vmatpush1.bf16.xpose.msra.mxu0 0
    %559 = vmatprep.subr.bf16.mxu0 0
    %560 = vmatpush1.bf16.xpose.msra.mxu0 0
    %561 = vmatprep.subr.bf16.mxu0 0
    %562 = vmatpush1.bf16.xpose.msra.mxu0 0
    %563 = vmatprep.subr.bf16.mxu0 0
    %564 = vmatpush1.bf16.xpose.msra.mxu0 0
    %565 = vmatprep.subr.bf16.mxu0 0
    %566 = vmatpush1.bf16.xpose.msra.mxu0 0
    %567 = vmatprep.subr.bf16.mxu0 0
    %568 = vmatpush1.bf16.xpose.msra.mxu0 0
    %569 = vmatprep.subr.bf16.mxu0 0
    %570 = vmatpush1.bf16.xpose.msra.mxu0 0
    %571 = vmatprep.subr.bf16.mxu0 0
    %572 = vmatpush1.bf16.xpose.msra.mxu0 0
    %573 = vmatprep.subr.bf16.mxu0 0
    %574 = vmatpush1.bf16.xpose.msra.mxu0 0
    %575 = vmatprep.subr.bf16.mxu0 0
    %576 = vmatpush1.bf16.xpose.msra.mxu0 0
    %577 = vmatprep.subr.bf16.mxu0 0
    %578 = vmatpush1.bf16.xpose.msra.mxu0 0
    %579 = vmatprep.subr.bf16.mxu0 0
    %580 = vmatpush1.bf16.xpose.msra.mxu0 0
    %581 = vmatprep.subr.bf16.mxu0 0
    %582 = vmatpush1.bf16.xpose.msra.mxu0 0
    %583 = vmatprep.mubr.bf16.mxu0 0
    %584 = vmatmul.mubr.bf16.gmra.mrb[0].mxu0 %v546
    %v585 = vpop.f32.mrb[0].mxu0
    %v586 = vadd.f32 0.0, %v585
    %v587 = vpop.f32.mrb[0].mxu0
    %v588 = vpop.f32.mrb[0].mxu0
    %v589 = vpop.f32.mrb[0].mxu0
    %590 = vdwg.mxu0
    %v591 = vmul.f32 %v536, 0.25
    %v592 = vmul.f32 %v586, 0.25
    %v593 = vsel %vm367, %v591, -1e+09
    %v594 = vsel %vm367, %v592, -1e+09
    %v595 = vsel %vm370, %v593, -inf
    %596 = vmax.xlane.f32.xlu0 %v595
    %v597 = vpop.xlane.xlu0 %596
    %v598 = vsel %vm370, %v594, -inf
    %599 = vmax.xlane.f32.xlu0 %v598
    %v600 = vpop.xlane.xlu0 %599
    %v601 = vsub.f32 %v593, %v597
    %v602 = vsub.f32 %v594, %v600
    %v603 = vmul.f32 %v601, 1.442695
    %v604 = vpow.pop %v603
    %v605 = vmul.f32 %v602, 1.442695
    %v606 = vpow.pop %v605
    %v607 = vsel %vm370, %v604, 0.0
    %608 = vadd.xlane.f32.xlu0 %v607
    %v609 = vpop.xlane.xlu0 %608
    %v610 = vsel %vm370, %v606, 0.0
    %611 = vadd.xlane.f32.xlu0 %v610
    %v612 = vpop.xlane.xlu0 %611
    %v613 = vrcp.pop %v609
    %v614 = vrcp.pop %v612
    %v615 = vmul.f32 %v604, %v613
    %v616 = vmul.f32 %v606, %v614
    %v617 = vpack.c.bf16 %v615, %v615
    %v618 = vpack.c.bf16 %v616, %v616
    %619 = vrot.lane.b32.xlu0 %v263, 48
    %v620 = vpop.permute.xlu0 %619
    %v622 = vsel %vm370, %v617, 0
    %v625 = vsel %vm142, %v620, 0
    %627 = vmatprep.subr.bf16.mxu0 0
    %628 = vmatpush1.bf16.msra.mxu0 %v625
    %629 = vmatprep.subr.bf16.mxu0 0
    %630 = vmatpush1.bf16.msra.mxu0 0
    %631 = vmatprep.subr.bf16.mxu0 0
    %632 = vmatpush1.bf16.msra.mxu0 0
    %633 = vmatprep.subr.bf16.mxu0 0
    %634 = vmatpush1.bf16.msra.mxu0 0
    %635 = vmatprep.subr.bf16.mxu0 0
    %636 = vmatpush1.bf16.msra.mxu0 0
    %637 = vmatprep.subr.bf16.mxu0 0
    %638 = vmatpush1.bf16.msra.mxu0 0
    %639 = vmatprep.subr.bf16.mxu0 0
    %640 = vmatpush1.bf16.msra.mxu0 0
    %641 = vmatprep.subr.bf16.mxu0 0
    %642 = vmatpush1.bf16.msra.mxu0 0
    %643 = vmatprep.subr.bf16.mxu0 0
    %644 = vmatpush1.bf16.msra.mxu0 0
    %645 = vmatprep.subr.bf16.mxu0 0
    %646 = vmatpush1.bf16.msra.mxu0 0
    %647 = vmatprep.subr.bf16.mxu0 0
    %648 = vmatpush1.bf16.msra.mxu0 0
    %649 = vmatprep.subr.bf16.mxu0 0
    %650 = vmatpush1.bf16.msra.mxu0 0
    %651 = vmatprep.subr.bf16.mxu0 0
    %652 = vmatpush1.bf16.msra.mxu0 0
    %653 = vmatprep.subr.bf16.mxu0 0
    %654 = vmatpush1.bf16.msra.mxu0 0
    %655 = vmatprep.subr.bf16.mxu0 0
    %656 = vmatpush1.bf16.msra.mxu0 0
    %657 = vmatprep.subr.bf16.mxu0 0
    %658 = vmatpush1.bf16.msra.mxu0 0
    %659 = vmatprep.mubr.bf16.mxu0 0
    %660 = vmatmul.mubr.bf16.gmra.mrb[0].mxu0 %v622
    %v661 = vpop.f32.mrb[0].mxu0
    %v662 = vadd.f32 0.0, %v661
    %v663 = vpop.f32.mrb[0].mxu0
    %v664 = vpop.f32.mrb[0].mxu0
    %v665 = vpop.f32.mrb[0].mxu0
    %666 = vdwg.mxu0
    %667 = vrot.lane.b32.xlu0 %v264, 48
    %v668 = vpop.permute.xlu0 %667
    %v670 = vsel %vm370, %v618, 0
    %v673 = vsel %vm142, %v668, 0
    %675 = vmatprep.subr.bf16.mxu0 0
    %676 = vmatpush1.bf16.msra.mxu0 %v673
    %677 = vmatprep.subr.bf16.mxu0 0
    %678 = vmatpush1.bf16.msra.mxu0 0
    %679 = vmatprep.subr.bf16.mxu0 0
    %680 = vmatpush1.bf16.msra.mxu0 0
    %681 = vmatprep.subr.bf16.mxu0 0
    %682 = vmatpush1.bf16.msra.mxu0 0
    %683 = vmatprep.subr.bf16.mxu0 0
    %684 = vmatpush1.bf16.msra.mxu0 0
    %685 = vmatprep.subr.bf16.mxu0 0
    %686 = vmatpush1.bf16.msra.mxu0 0
    %687 = vmatprep.subr.bf16.mxu0 0
    %688 = vmatpush1.bf16.msra.mxu0 0
    %689 = vmatprep.subr.bf16.mxu0 0
    %690 = vmatpush1.bf16.msra.mxu0 0
    %691 = vmatprep.subr.bf16.mxu0 0
    %692 = vmatpush1.bf16.msra.mxu0 0
    %693 = vmatprep.subr.bf16.mxu0 0
    %694 = vmatpush1.bf16.msra.mxu0 0
    %695 = vmatprep.subr.bf16.mxu0 0
    %696 = vmatpush1.bf16.msra.mxu0 0
    %697 = vmatprep.subr.bf16.mxu0 0
    %698 = vmatpush1.bf16.msra.mxu0 0
    %699 = vmatprep.subr.bf16.mxu0 0
    %700 = vmatpush1.bf16.msra.mxu0 0
    %701 = vmatprep.subr.bf16.mxu0 0
    %702 = vmatpush1.bf16.msra.mxu0 0
    %703 = vmatprep.subr.bf16.mxu0 0
    %704 = vmatpush1.bf16.msra.mxu0 0
    %705 = vmatprep.subr.bf16.mxu0 0
    %706 = vmatpush1.bf16.msra.mxu0 0
    %707 = vmatprep.mubr.bf16.mxu0 0
    %708 = vmatmul.mubr.bf16.gmra.mrb[0].mxu0 %v670
    %v709 = vpop.f32.mrb[0].mxu0
    %v710 = vadd.f32 0.0, %v709
    %v711 = vpop.f32.mrb[0].mxu0
    %v712 = vpop.f32.mrb[0].mxu0
    %v713 = vpop.f32.mrb[0].mxu0
    %714 = vdwg.mxu0
    %717 = vrot.lane.b32.xlu0 %v662, 16
    %v718 = vpop.permute.xlu0 %717
    %719 = vrot.lane.b32.xlu0 %v710, 16
    %v720 = vpop.permute.xlu0 %719
    %v723 = vsel %vm268, %v438, %v718
    %v724 = vsel %vm268, %v486, %v720
    %v725 = vpack.c.bf16 %v724, %v723
    %v726 = vlaneseq
    %v727 = vshrl.u32 %v726, 7
    %v728 = vsub.s32 0, %v727
    %v729 = vrot.slane %v194, %v728
    %v734 = vunpack.c.l.b16 %v169
    %v735 = vunpack.c.l.b16 %v170
    %v736 = vunpack.c.l.b16 %v171
    %v737 = vunpack.c.l.b16 %v172
    %v738 = vpack.c.b16 %v735, %v734
    %v739 = vpack.c.b16 %v737, %v736
    %v743 = vsel %vm218, %v725, 0
    %745 = vmatprep.subr.bf16.mxu0 0
    %746 = vmatpush1.bf16.msra.mxu0 %v738
    %747 = vmatprep.subr.bf16.mxu0 0
    %748 = vmatpush1.bf16.msra.mxu0 %v739
    %749 = vmatprep.subr.bf16.mxu0 0
    %750 = vmatpush1.bf16.msra.mxu0 0
    %751 = vmatprep.subr.bf16.mxu0 0
    %752 = vmatpush1.bf16.msra.mxu0 0
    %753 = vmatprep.subr.bf16.mxu0 0
    %754 = vmatpush1.bf16.msra.mxu0 0
    %755 = vmatprep.subr.bf16.mxu0 0
    %756 = vmatpush1.bf16.msra.mxu0 0
    %757 = vmatprep.subr.bf16.mxu0 0
    %758 = vmatpush1.bf16.msra.mxu0 0
    %759 = vmatprep.subr.bf16.mxu0 0
    %760 = vmatpush1.bf16.msra.mxu0 0
    %761 = vmatprep.subr.bf16.mxu0 0
    %762 = vmatpush1.bf16.msra.mxu0 0
    %763 = vmatprep.subr.bf16.mxu0 0
    %764 = vmatpush1.bf16.msra.mxu0 0
    %765 = vmatprep.subr.bf16.mxu0 0
    %766 = vmatpush1.bf16.msra.mxu0 0
    %767 = vmatprep.subr.bf16.mxu0 0
    %768 = vmatpush1.bf16.msra.mxu0 0
    %769 = vmatprep.subr.bf16.mxu0 0
    %770 = vmatpush1.bf16.msra.mxu0 0
    %771 = vmatprep.subr.bf16.mxu0 0
    %772 = vmatpush1.bf16.msra.mxu0 0
    %773 = vmatprep.subr.bf16.mxu0 0
    %774 = vmatpush1.bf16.msra.mxu0 0
    %775 = vmatprep.subr.bf16.mxu0 0
    %776 = vmatpush1.bf16.msra.mxu0 0
    %777 = vmatprep.mubr.bf16.mxu0 0
    %778 = vmatmul.mubr.bf16.gmra.mrb[0].mxu0 %v743
    %v779 = vpop.f32.mrb[0].mxu0
    %v780 = vadd.f32 %v729, %v779
    %v781 = vpop.f32.mrb[0].mxu0
    %v782 = vpop.f32.mrb[0].mxu0
    %v783 = vadd.f32 %v729, %v782
    %v784 = vpop.f32.mrb[0].mxu0
    %785 = vdwg.mxu0
    %v786 = vadd.f32 %v158, %v780
    %v787 = vadd.f32 %v159, %v783
    %v788 = vsel %vm218, %v786, 0.0
    %789 = vadd.xlane.f32.xlu0 %v788
    %v790 = vpop.xlane.xlu0 %789
    %v791 = vsel %vm218, %v787, 0.0
    %792 = vadd.xlane.f32.xlu0 %v791
    %v793 = vpop.xlane.xlu0 %792
    %v794 = vrcp.pop 32.0
    %v795 = vmul.f32 %v790, %v794
    %v796 = vmul.f32 %v793, %v794
    %v797 = vsub.f32 %v786, %v795
    %v798 = vsub.f32 %v787, %v796
    %v799 = vmul.f32 %v797, %v797
    %v800 = vmul.f32 %v798, %v798
    %v801 = vsel %vm218, %v799, 0.0
    %802 = vadd.xlane.f32.xlu0 %v801
    %v803 = vpop.xlane.xlu0 %802
    %v804 = vsel %vm218, %v800, 0.0
    %805 = vadd.xlane.f32.xlu0 %v804
    %v806 = vpop.xlane.xlu0 %805
    %v807 = vmul.f32 %v803, %v794
    %v808 = vmul.f32 %v806, %v794
    %v809 = vadd.f32 %v807, 1e-05
    %v810 = vadd.f32 %v808, 1e-05
    %v811 = vrsqrt.pop %v809
    %v812 = vrsqrt.pop %v810
    %v813 = vmul.f32 %v797, %v811
    %v814 = vmul.f32 %v798, %v812
    %v815 = vlaneseq
    %v816 = vshrl.u32 %v815, 7
    %v817 = vsub.s32 0, %v816
    %v818 = vrot.slane %v195, %v817
    %v819 = vmul.f32 %v813, %v818
    %v820 = vmul.f32 %v814, %v818
    %v821 = vlaneseq
    %v822 = vshrl.u32 %v821, 7
    %v823 = vsub.s32 0, %v822
    %v824 = vrot.slane %v196, %v823
    %v825 = vadd.f32 %v819, %v824
    %v826 = vadd.f32 %v820, %v824
    %v827 = vpack.c.bf16 %v826, %v825
    %v828 = vlaneseq
    %v829 = vshrl.u32 %v828, 7
    %v830 = vsub.s32 0, %v829
    %v831 = vrot.slane %v197, %v830
    %v836 = vunpack.c.l.b16 %v173
    %v837 = vunpack.c.l.b16 %v174
    %v838 = vunpack.c.l.b16 %v175
    %v839 = vunpack.c.l.b16 %v176
    %v840 = vpack.c.b16 %v837, %v836
    %v841 = vpack.c.b16 %v839, %v838
    %v845 = vsel %vm218, %v827, 0
    %847 = vmatprep.subr.bf16.mxu0 0
    %848 = vmatpush1.bf16.msra.mxu0 %v840
    %849 = vmatprep.subr.bf16.mxu0 0
    %850 = vmatpush1.bf16.msra.mxu0 %v841
    %851 = vmatprep.subr.bf16.mxu0 0
    %852 = vmatpush1.bf16.msra.mxu0 0
    %853 = vmatprep.subr.bf16.mxu0 0
    %854 = vmatpush1.bf16.msra.mxu0 0
    %855 = vmatprep.subr.bf16.mxu0 0
    %856 = vmatpush1.bf16.msra.mxu0 0
    %857 = vmatprep.subr.bf16.mxu0 0
    %858 = vmatpush1.bf16.msra.mxu0 0
    %859 = vmatprep.subr.bf16.mxu0 0
    %860 = vmatpush1.bf16.msra.mxu0 0
    %861 = vmatprep.subr.bf16.mxu0 0
    %862 = vmatpush1.bf16.msra.mxu0 0
    %863 = vmatprep.subr.bf16.mxu0 0
    %864 = vmatpush1.bf16.msra.mxu0 0
    %865 = vmatprep.subr.bf16.mxu0 0
    %866 = vmatpush1.bf16.msra.mxu0 0
    %867 = vmatprep.subr.bf16.mxu0 0
    %868 = vmatpush1.bf16.msra.mxu0 0
    %869 = vmatprep.subr.bf16.mxu0 0
    %870 = vmatpush1.bf16.msra.mxu0 0
    %871 = vmatprep.subr.bf16.mxu0 0
    %872 = vmatpush1.bf16.msra.mxu0 0
    %873 = vmatprep.subr.bf16.mxu0 0
    %874 = vmatpush1.bf16.msra.mxu0 0
    %875 = vmatprep.subr.bf16.mxu0 0
    %876 = vmatpush1.bf16.msra.mxu0 0
    %877 = vmatprep.subr.bf16.mxu0 0
    %878 = vmatpush1.bf16.msra.mxu0 0
    %879 = vmatprep.mubr.bf16.mxu0 0
    %880 = vmatmul.mubr.bf16.gmra.mrb[0].mxu0 %v845
    %v881 = vpop.f32.mrb[0].mxu0
    %v882 = vadd.f32 %v831, %v881
    %v883 = vpop.f32.mrb[0].mxu0
    %v884 = vpop.f32.mrb[0].mxu0
    %v885 = vadd.f32 %v831, %v884
    %v886 = vpop.f32.mrb[0].mxu0
    %887 = vdwg.mxu0
    %v888 = vmax.f32 %v882, 0.0
    %v889 = vmax.f32 %v885, 0.0
    %v890 = vpack.c.bf16 %v889, %v888
    %v891 = vlaneseq
    %v892 = vshrl.u32 %v891, 7
    %v893 = vsub.s32 0, %v892
    %v894 = vrot.slane %v198, %v893
    %v911 = vunpack.c.l.b16 %v177
    %v912 = vunpack.c.l.b16 %v178
    %v913 = vunpack.c.l.b16 %v179
    %v914 = vunpack.c.l.b16 %v180
    %v915 = vunpack.c.l.b16 %v181
    %v916 = vunpack.c.l.b16 %v182
    %v917 = vunpack.c.l.b16 %v183
    %v918 = vunpack.c.l.b16 %v184
    %v919 = vunpack.c.l.b16 %v185
    %v920 = vunpack.c.l.b16 %v186
    %v921 = vunpack.c.l.b16 %v187
    %v922 = vunpack.c.l.b16 %v188
    %v923 = vunpack.c.l.b16 %v189
    %v924 = vunpack.c.l.b16 %v190
    %v925 = vunpack.c.l.b16 %v191
    %v926 = vunpack.c.l.b16 %v192
    %v927 = vpack.c.b16 %v912, %v911
    %v928 = vpack.c.b16 %v914, %v913
    %v929 = vpack.c.b16 %v916, %v915
    %v930 = vpack.c.b16 %v918, %v917
    %v931 = vpack.c.b16 %v920, %v919
    %v932 = vpack.c.b16 %v922, %v921
    %v933 = vpack.c.b16 %v924, %v923
    %v934 = vpack.c.b16 %v926, %v925
    %943 = vmatprep.subr.bf16.mxu0 0
    %944 = vmatpush1.bf16.msra.mxu0 %v927
    %945 = vmatprep.subr.bf16.mxu0 0
    %946 = vmatpush1.bf16.msra.mxu0 %v928
    %947 = vmatprep.subr.bf16.mxu0 0
    %948 = vmatpush1.bf16.msra.mxu0 %v929
    %949 = vmatprep.subr.bf16.mxu0 0
    %950 = vmatpush1.bf16.msra.mxu0 %v930
    %951 = vmatprep.subr.bf16.mxu0 0
    %952 = vmatpush1.bf16.msra.mxu0 %v931
    %953 = vmatprep.subr.bf16.mxu0 0
    %954 = vmatpush1.bf16.msra.mxu0 %v932
    %955 = vmatprep.subr.bf16.mxu0 0
    %956 = vmatpush1.bf16.msra.mxu0 %v933
    %957 = vmatprep.subr.bf16.mxu0 0
    %958 = vmatpush1.bf16.msra.mxu0 %v934
    %959 = vmatprep.subr.bf16.mxu0 0
    %960 = vmatpush1.bf16.msra.mxu0 0
    %961 = vmatprep.subr.bf16.mxu0 0
    %962 = vmatpush1.bf16.msra.mxu0 0
    %963 = vmatprep.subr.bf16.mxu0 0
    %964 = vmatpush1.bf16.msra.mxu0 0
    %965 = vmatprep.subr.bf16.mxu0 0
    %966 = vmatpush1.bf16.msra.mxu0 0
    %967 = vmatprep.subr.bf16.mxu0 0
    %968 = vmatpush1.bf16.msra.mxu0 0
    %969 = vmatprep.subr.bf16.mxu0 0
    %970 = vmatpush1.bf16.msra.mxu0 0
    %971 = vmatprep.subr.bf16.mxu0 0
    %972 = vmatpush1.bf16.msra.mxu0 0
    %973 = vmatprep.subr.bf16.mxu0 0
    %974 = vmatpush1.bf16.msra.mxu0 0
    %975 = vmatprep.mubr.bf16.mxu0 0
    %976 = vmatmul.mubr.bf16.gmra.mrb[0].mxu0 %v890
    %v977 = vpop.f32.mrb[0].mxu0
    %v978 = vadd.f32 %v894, %v977
    %v979 = vpop.f32.mrb[0].mxu0
    %v980 = vpop.f32.mrb[0].mxu0
    %v981 = vadd.f32 %v894, %v980
    %v982 = vpop.f32.mrb[0].mxu0
    %983 = vdwg.mxu0
    %v984 = vadd.f32 %v825, %v978
    %v985 = vadd.f32 %v826, %v981
    %v986 = vsel %vm218, %v984, 0.0
    %987 = vadd.xlane.f32.xlu0 %v986
    %v988 = vpop.xlane.xlu0 %987
    %v989 = vsel %vm218, %v985, 0.0
    %990 = vadd.xlane.f32.xlu0 %v989
    %v991 = vpop.xlane.xlu0 %990
    %v992 = vmul.f32 %v988, %v794
    %v993 = vmul.f32 %v991, %v794
    %v994 = vsub.f32 %v984, %v992
    %v995 = vsub.f32 %v985, %v993
    %v996 = vmul.f32 %v994, %v994
    %v997 = vmul.f32 %v995, %v995
    %v998 = vsel %vm218, %v996, 0.0
    %999 = vadd.xlane.f32.xlu0 %v998
    %v1000 = vpop.xlane.xlu0 %999
    %v1001 = vsel %vm218, %v997, 0.0
    %1002 = vadd.xlane.f32.xlu0 %v1001
    %v1003 = vpop.xlane.xlu0 %1002
    %v1004 = vmul.f32 %v1000, %v794
    %v1005 = vmul.f32 %v1003, %v794
    %v1006 = vadd.f32 %v1004, 1e-05
    %v1007 = vadd.f32 %v1005, 1e-05
    %v1008 = vrsqrt.pop %v1006
    %v1009 = vrsqrt.pop %v1007
    %v1010 = vmul.f32 %v994, %v1008
    %v1011 = vmul.f32 %v995, %v1009
    %v1012 = vlaneseq
    %v1013 = vshrl.u32 %v1012, 7
    %v1014 = vsub.s32 0, %v1013
    %v1015 = vrot.slane %v199, %v1014
    %v1016 = vmul.f32 %v1010, %v1015
    %v1017 = vmul.f32 %v1011, %v1015
    %v1018 = vlaneseq
    %v1019 = vshrl.u32 %v1018, 7
    %v1020 = vsub.s32 0, %v1019
    %v1021 = vrot.slane %v200, %v1020
    %v1022 = vadd.f32 %v1016, %v1021
    %v1023 = vadd.f32 %v1017, %v1021
    %s1024 = scalar_lea.vmem [#allocation4], 112
    %v1025 = vld [vmem:[%s1024] sm:$0xf]
    %v1026 = vld [vmem:[%s1024 + $0x4] sm:$0xf]
    %v1027 = vld [vmem:[%s1024 + $0x8] sm:$0xf]
    %v1028 = vld [vmem:[%s1024 + $0xc] sm:$0xf]
    %v1029 = vld [vmem:[%s1024 + $0x10] sm:$0xf]
    %v1030 = vld [vmem:[%s1024 + $0x14] sm:$0xf]
    %v1031 = vld [vmem:[%s1024 + $0x18] sm:$0xf]
    %v1032 = vld [vmem:[%s1024 + $0x1c] sm:$0xf]
    %v1033 = vld [vmem:[%s1024 + $0x20] sm:$0xf]
    %v1034 = vld [vmem:[%s1024 + $0x24] sm:$0xf]
    %v1035 = vld [vmem:[%s1024 + $0x28] sm:$0xf]
    %v1036 = vld [vmem:[%s1024 + $0x2c] sm:$0xf]
    %v1037 = vld [vmem:[%s1024 + $0x30] sm:$0xf]
    %v1038 = vld [vmem:[%s1024 + $0x34] sm:$0xf]
    %v1039 = vld [vmem:[%s1024 + $0x38] sm:$0xf]
    %v1040 = vld [vmem:[%s1024 + $0x3c] sm:$0xf]
    %v1041 = vld [vmem:[%s1024 + $0x40] sm:$0xf]
    %v1042 = vld [vmem:[%s1024 + $0x44] sm:$0xf]
    %v1043 = vld [vmem:[%s1024 + $0x48] sm:$0xf]
    %v1044 = vld [vmem:[%s1024 + $0x4c] sm:$0xf]
    %v1045 = vld [vmem:[%s1024 + $0x50] sm:$0xf]
    %v1046 = vld [vmem:[%s1024 + $0x54] sm:$0xf]
    %v1047 = vld [vmem:[%s1024 + $0x58] sm:$0xf]
    %v1048 = vld [vmem:[%s1024 + $0x5c] sm:$0xf]
    %v1049 = vld [vmem:[%s1024 + $0x60] sm:$0xf]
    %v1050 = vld [vmem:[%s1024 + $0x64] sm:$0xf]
    %v1051 = vld [vmem:[%s1024 + $0x68] sm:$0xf]
    %v1052 = vld [vmem:[%s1024 + $0x6c] sm:$0xf]
    %s1053 = scalar_lea.vmem %s4, 8
    %v1054 = vld [vmem:[%s1053] sm:$0x1]
    %v1055 = vld [vmem:[%s1053 + $0x1] sm:$0x1]
    %v1056 = vld [vmem:[%s1053 + $0x2] sm:$0x1]
    %v1057 = vld [vmem:[%s1053 + $0x3] sm:$0x1]
    %v1058 = vld [vmem:[%s1053 + $0x4] sm:$0x1]
    %v1059 = vld [vmem:[%s1053 + $0x5] sm:$0x1]
    %v1060 = vld [vmem:[%s1053 + $0x6] sm:$0x1]
    %v1061 = vld [vmem:[%s1053 + $0x7] sm:$0x1]
    %v1062 = vpack.c.bf16 %v1023, %v1022
    %v1063 = vlaneseq
    %v1064 = vshrl.u32 %v1063, 7
    %v1065 = vsub.s32 0, %v1064
    %v1066 = vrot.slane %v1054, %v1065
    %v1071 = vunpack.c.l.b16 %v1025
    %v1072 = vunpack.c.l.b16 %v1026
    %v1073 = vunpack.c.l.b16 %v1027
    %v1074 = vunpack.c.l.b16 %v1028
    %v1075 = vpack.c.b16 %v1072, %v1071
    %v1076 = vpack.c.b16 %v1074, %v1073
    %v1080 = vsel %vm218, %v1062, 0
    %1082 = vmatprep.subr.bf16.mxu0 0
    %1083 = vmatpush1.bf16.msra.mxu0 %v1075
    %1084 = vmatprep.subr.bf16.mxu0 0
    %1085 = vmatpush1.bf16.msra.mxu0 %v1076
    %1086 = vmatprep.subr.bf16.mxu0 0
    %1087 = vmatpush1.bf16.msra.mxu0 0
    %1088 = vmatprep.subr.bf16.mxu0 0
    %1089 = vmatpush1.bf16.msra.mxu0 0
    %1090 = vmatprep.subr.bf16.mxu0 0
    %1091 = vmatpush1.bf16.msra.mxu0 0
    %1092 = vmatprep.subr.bf16.mxu0 0
    %1093 = vmatpush1.bf16.msra.mxu0 0
    %1094 = vmatprep.subr.bf16.mxu0 0
    %1095 = vmatpush1.bf16.msra.mxu0 0
    %1096 = vmatprep.subr.bf16.mxu0 0
    %1097 = vmatpush1.bf16.msra.mxu0 0
    %1098 = vmatprep.subr.bf16.mxu0 0
    %1099 = vmatpush1.bf16.msra.mxu0 0
    %1100 = vmatprep.subr.bf16.mxu0 0
    %1101 = vmatpush1.bf16.msra.mxu0 0
    %1102 = vmatprep.subr.bf16.mxu0 0
    %1103 = vmatpush1.bf16.msra.mxu0 0
    %1104 = vmatprep.subr.bf16.mxu0 0
    %1105 = vmatpush1.bf16.msra.mxu0 0
    %1106 = vmatprep.subr.bf16.mxu0 0
    %1107 = vmatpush1.bf16.msra.mxu0 0
    %1108 = vmatprep.subr.bf16.mxu0 0
    %1109 = vmatpush1.bf16.msra.mxu0 0
    %1110 = vmatprep.subr.bf16.mxu0 0
    %1111 = vmatpush1.bf16.msra.mxu0 0
    %1112 = vmatprep.subr.bf16.mxu0 0
    %1113 = vmatpush1.bf16.msra.mxu0 0
    %1114 = vmatprep.mubr.bf16.mxu0 0
    %1115 = vmatmul.mubr.bf16.gmra.mrb[0].mxu0 %v1080
    %v1116 = vpop.f32.mrb[0].mxu0
    %v1117 = vadd.f32 %v1066, %v1116
    %v1118 = vpop.f32.mrb[0].mxu0
    %v1119 = vpop.f32.mrb[0].mxu0
    %v1120 = vadd.f32 %v1066, %v1119
    %v1121 = vpop.f32.mrb[0].mxu0
    %1122 = vdwg.mxu0
    %v1123 = vpack.c.bf16 %v1117, %v1117
    %v1124 = vpack.c.bf16 %v1120, %v1120
    %1126 = vrot.lane.b32.xlu0 %v1123, 96
    %v1127 = vpop.permute.xlu0 %1126
    %v1129 = vsel %vm268, %v1123, 0
    %v1132 = vsel %vm268, %v1127, 0
    %1134 = vmatprep.subr.bf16.mxu0 0
    %1135 = vmatpush1.bf16.xpose.msra.mxu0 %v1132
    %1136 = vmatprep.subr.bf16.mxu0 0
    %1137 = vmatpush1.bf16.xpose.msra.mxu0 0
    %1138 = vmatprep.subr.bf16.mxu0 0
    %1139 = vmatpush1.bf16.xpose.msra.mxu0 0
    %1140 = vmatprep.subr.bf16.mxu0 0
    %1141 = vmatpush1.bf16.xpose.msra.mxu0 0
    %1142 = vmatprep.subr.bf16.mxu0 0
    %1143 = vmatpush1.bf16.xpose.msra.mxu0 0
    %1144 = vmatprep.subr.bf16.mxu0 0
    %1145 = vmatpush1.bf16.xpose.msra.mxu0 0
    %1146 = vmatprep.subr.bf16.mxu0 0
    %1147 = vmatpush1.bf16.xpose.msra.mxu0 0
    %1148 = vmatprep.subr.bf16.mxu0 0
    %1149 = vmatpush1.bf16.xpose.msra.mxu0 0
    %1150 = vmatprep.subr.bf16.mxu0 0
    %1151 = vmatpush1.bf16.xpose.msra.mxu0 0
    %1152 = vmatprep.subr.bf16.mxu0 0
    %1153 = vmatpush1.bf16.xpose.msra.mxu0 0
    %1154 = vmatprep.subr.bf16.mxu0 0
    %1155 = vmatpush1.bf16.xpose.msra.mxu0 0
    %1156 = vmatprep.subr.bf16.mxu0 0
    %1157 = vmatpush1.bf16.xpose.msra.mxu0 0
    %1158 = vmatprep.subr.bf16.mxu0 0
    %1159 = vmatpush1.bf16.xpose.msra.mxu0 0
    %1160 = vmatprep.subr.bf16.mxu0 0
    %1161 = vmatpush1.bf16.xpose.msra.mxu0 0
    %1162 = vmatprep.subr.bf16.mxu0 0
    %1163 = vmatpush1.bf16.xpose.msra.mxu0 0
    %1164 = vmatprep.subr.bf16.mxu0 0
    %1165 = vmatpush1.bf16.xpose.msra.mxu0 0
    %1166 = vmatprep.mubr.bf16.mxu0 0
    %1167 = vmatmul.mubr.bf16.gmra.mrb[0].mxu0 %v1129
    %v1168 = vpop.f32.mrb[0].mxu0
    %v1169 = vadd.f32 0.0, %v1168
    %v1170 = vpop.f32.mrb[0].mxu0
    %v1171 = vpop.f32.mrb[0].mxu0
    %v1172 = vpop.f32.mrb[0].mxu0
    %1173 = vdwg.mxu0
    %1175 = vrot.lane.b32.xlu0 %v1124, 96
    %v1176 = vpop.permute.xlu0 %1175
    %v1178 = vsel %vm268, %v1124, 0
    %v1181 = vsel %vm268, %v1176, 0
    %1183 = vmatprep.subr.bf16.mxu0 0
    %1184 = vmatpush1.bf16.xpose.msra.mxu0 %v1181
    %1185 = vmatprep.subr.bf16.mxu0 0
    %1186 = vmatpush1.bf16.xpose.msra.mxu0 0
    %1187 = vmatprep.subr.bf16.mxu0 0
    %1188 = vmatpush1.bf16.xpose.msra.mxu0 0
    %1189 = vmatprep.subr.bf16.mxu0 0
    %1190 = vmatpush1.bf16.xpose.msra.mxu0 0
    %1191 = vmatprep.subr.bf16.mxu0 0
    %1192 = vmatpush1.bf16.xpose.msra.mxu0 0
    %1193 = vmatprep.subr.bf16.mxu0 0
    %1194 = vmatpush1.bf16.xpose.msra.mxu0 0
    %1195 = vmatprep.subr.bf16.mxu0 0
    %1196 = vmatpush1.bf16.xpose.msra.mxu0 0
    %1197 = vmatprep.subr.bf16.mxu0 0
    %1198 = vmatpush1.bf16.xpose.msra.mxu0 0
    %1199 = vmatprep.subr.bf16.mxu0 0
    %1200 = vmatpush1.bf16.xpose.msra.mxu0 0
    %1201 = vmatprep.subr.bf16.mxu0 0
    %1202 = vmatpush1.bf16.xpose.msra.mxu0 0
    %1203 = vmatprep.subr.bf16.mxu0 0
    %1204 = vmatpush1.bf16.xpose.msra.mxu0 0
    %1205 = vmatprep.subr.bf16.mxu0 0
    %1206 = vmatpush1.bf16.xpose.msra.mxu0 0
    %1207 = vmatprep.subr.bf16.mxu0 0
    %1208 = vmatpush1.bf16.xpose.msra.mxu0 0
    %1209 = vmatprep.subr.bf16.mxu0 0
    %1210 = vmatpush1.bf16.xpose.msra.mxu0 0
    %1211 = vmatprep.subr.bf16.mxu0 0
    %1212 = vmatpush1.bf16.xpose.msra.mxu0 0
    %1213 = vmatprep.subr.bf16.mxu0 0
    %1214 = vmatpush1.bf16.xpose.msra.mxu0 0
    %1215 = vmatprep.mubr.bf16.mxu0 0
    %1216 = vmatmul.mubr.bf16.gmra.mrb[0].mxu0 %v1178
    %v1217 = vpop.f32.mrb[0].mxu0
    %v1218 = vadd.f32 0.0, %v1217
    %v1219 = vpop.f32.mrb[0].mxu0
    %v1220 = vpop.f32.mrb[0].mxu0
    %v1221 = vpop.f32.mrb[0].mxu0
    %1222 = vdwg.mxu0
    %v1223 = vmul.f32 %v1169, 0.25
    %v1224 = vmul.f32 %v1218, 0.25
    %v1225 = vsel %vm367, %v1223, -1e+09
    %v1226 = vsel %vm367, %v1224, -1e+09
    %v1227 = vsel %vm370, %v1225, -inf
    %1228 = vmax.xlane.f32.xlu0 %v1227
    %v1229 = vpop.xlane.xlu0 %1228
    %v1230 = vsel %vm370, %v1226, -inf
    %1231 = vmax.xlane.f32.xlu0 %v1230
    %v1232 = vpop.xlane.xlu0 %1231
    %v1233 = vsub.f32 %v1225, %v1229
    %v1234 = vsub.f32 %v1226, %v1232
    %v1235 = vmul.f32 %v1233, 1.442695
    %v1236 = vpow.pop %v1235
    %v1237 = vmul.f32 %v1234, 1.442695
    %v1238 = vpow.pop %v1237
    %v1239 = vsel %vm370, %v1236, 0.0
    %1240 = vadd.xlane.f32.xlu0 %v1239
    %v1241 = vpop.xlane.xlu0 %1240
    %v1242 = vsel %vm370, %v1238, 0.0
    %1243 = vadd.xlane.f32.xlu0 %v1242
    %v1244 = vpop.xlane.xlu0 %1243
    %v1245 = vrcp.pop %v1241
    %v1246 = vrcp.pop %v1244
    %v1247 = vmul.f32 %v1236, %v1245
    %v1248 = vmul.f32 %v1238, %v1246
    %v1249 = vpack.c.bf16 %v1247, %v1247
    %v1250 = vpack.c.bf16 %v1248, %v1248
    %1251 = vrot.lane.b32.xlu0 %v1123, 64
    %v1252 = vpop.permute.xlu0 %1251
    %v1254 = vsel %vm370, %v1249, 0
    %v1257 = vsel %vm142, %v1252, 0
    %1259 = vmatprep.subr.bf16.mxu0 0
    %1260 = vmatpush1.bf16.msra.mxu0 %v1257
    %1261 = vmatprep.subr.bf16.mxu0 0
    %1262 = vmatpush1.bf16.msra.mxu0 0
    %1263 = vmatprep.subr.bf16.mxu0 0
    %1264 = vmatpush1.bf16.msra.mxu0 0
    %1265 = vmatprep.subr.bf16.mxu0 0
    %1266 = vmatpush1.bf16.msra.mxu0 0
    %1267 = vmatprep.subr.bf16.mxu0 0
    %1268 = vmatpush1.bf16.msra.mxu0 0
    %1269 = vmatprep.subr.bf16.mxu0 0
    %1270 = vmatpush1.bf16.msra.mxu0 0
    %1271 = vmatprep.subr.bf16.mxu0 0
    %1272 = vmatpush1.bf16.msra.mxu0 0
    %1273 = vmatprep.subr.bf16.mxu0 0
    %1274 = vmatpush1.bf16.msra.mxu0 0
    %1275 = vmatprep.subr.bf16.mxu0 0
    %1276 = vmatpush1.bf16.msra.mxu0 0
    %1277 = vmatprep.subr.bf16.mxu0 0
    %1278 = vmatpush1.bf16.msra.mxu0 0
    %1279 = vmatprep.subr.bf16.mxu0 0
    %1280 = vmatpush1.bf16.msra.mxu0 0
    %1281 = vmatprep.subr.bf16.mxu0 0
    %1282 = vmatpush1.bf16.msra.mxu0 0
    %1283 = vmatprep.subr.bf16.mxu0 0
    %1284 = vmatpush1.bf16.msra.mxu0 0
    %1285 = vmatprep.subr.bf16.mxu0 0
    %1286 = vmatpush1.bf16.msra.mxu0 0
    %1287 = vmatprep.subr.bf16.mxu0 0
    %1288 = vmatpush1.bf16.msra.mxu0 0
    %1289 = vmatprep.subr.bf16.mxu0 0
    %1290 = vmatpush1.bf16.msra.mxu0 0
    %1291 = vmatprep.mubr.bf16.mxu0 0
    %1292 = vmatmul.mubr.bf16.gmra.mrb[0].mxu0 %v1254
    %v1293 = vpop.f32.mrb[0].mxu0
    %v1294 = vadd.f32 0.0, %v1293
    %v1295 = vpop.f32.mrb[0].mxu0
    %v1296 = vpop.f32.mrb[0].mxu0
    %v1297 = vpop.f32.mrb[0].mxu0
    %1298 = vdwg.mxu0
    %1299 = vrot.lane.b32.xlu0 %v1124, 64
    %v1300 = vpop.permute.xlu0 %1299
    %v1302 = vsel %vm370, %v1250, 0
    %v1305 = vsel %vm142, %v1300, 0
    %1307 = vmatprep.subr.bf16.mxu0 0
    %1308 = vmatpush1.bf16.msra.mxu0 %v1305
    %1309 = vmatprep.subr.bf16.mxu0 0
    %1310 = vmatpush1.bf16.msra.mxu0 0
    %1311 = vmatprep.subr.bf16.mxu0 0
    %1312 = vmatpush1.bf16.msra.mxu0 0
    %1313 = vmatprep.subr.bf16.mxu0 0
    %1314 = vmatpush1.bf16.msra.mxu0 0
    %1315 = vmatprep.subr.bf16.mxu0 0
    %1316 = vmatpush1.bf16.msra.mxu0 0
    %1317 = vmatprep.subr.bf16.mxu0 0
    %1318 = vmatpush1.bf16.msra.mxu0 0
    %1319 = vmatprep.subr.bf16.mxu0 0
    %1320 = vmatpush1.bf16.msra.mxu0 0
    %1321 = vmatprep.subr.bf16.mxu0 0
    %1322 = vmatpush1.bf16.msra.mxu0 0
    %1323 = vmatprep.subr.bf16.mxu0 0
    %1324 = vmatpush1.bf16.msra.mxu0 0
    %1325 = vmatprep.subr.bf16.mxu0 0
    %1326 = vmatpush1.bf16.msra.mxu0 0
    %1327 = vmatprep.subr.bf16.mxu0 0
    %1328 = vmatpush1.bf16.msra.mxu0 0
    %1329 = vmatprep.subr.bf16.mxu0 0
    %1330 = vmatpush1.bf16.msra.mxu0 0
    %1331 = vmatprep.subr.bf16.mxu0 0
    %1332 = vmatpush1.bf16.msra.mxu0 0
    %1333 = vmatprep.subr.bf16.mxu0 0
    %1334 = vmatpush1.bf16.msra.mxu0 0
    %1335 = vmatprep.subr.bf16.mxu0 0
    %1336 = vmatpush1.bf16.msra.mxu0 0
    %1337 = vmatprep.subr.bf16.mxu0 0
    %1338 = vmatpush1.bf16.msra.mxu0 0
    %1339 = vmatprep.mubr.bf16.mxu0 0
    %1340 = vmatmul.mubr.bf16.gmra.mrb[0].mxu0 %v1302
    %v1341 = vpop.f32.mrb[0].mxu0
    %v1342 = vadd.f32 0.0, %v1341
    %v1343 = vpop.f32.mrb[0].mxu0
    %v1344 = vpop.f32.mrb[0].mxu0
    %v1345 = vpop.f32.mrb[0].mxu0
    %1346 = vdwg.mxu0
    %1347 = vrot.lane.b32.xlu0 %v1123, 112
    %v1348 = vpop.permute.xlu0 %1347
    %1349 = vrot.lane.b32.xlu0 %v1123, 80
    %v1350 = vpop.permute.xlu0 %1349
    %v1352 = vsel %vm268, %v1348, 0
    %v1355 = vsel %vm268, %v1350, 0
    %1357 = vmatprep.subr.bf16.mxu0 0
    %1358 = vmatpush1.bf16.xpose.msra.mxu0 %v1355
    %1359 = vmatprep.subr.bf16.mxu0 0
    %1360 = vmatpush1.bf16.xpose.msra.mxu0 0
    %1361 = vmatprep.subr.bf16.mxu0 0
    %1362 = vmatpush1.bf16.xpose.msra.mxu0 0
    %1363 = vmatprep.subr.bf16.mxu0 0
    %1364 = vmatpush1.bf16.xpose.msra.mxu0 0
    %1365 = vmatprep.subr.bf16.mxu0 0
    %1366 = vmatpush1.bf16.xpose.msra.mxu0 0
    %1367 = vmatprep.subr.bf16.mxu0 0
    %1368 = vmatpush1.bf16.xpose.msra.mxu0 0
    %1369 = vmatprep.subr.bf16.mxu0 0
    %1370 = vmatpush1.bf16.xpose.msra.mxu0 0
    %1371 = vmatprep.subr.bf16.mxu0 0
    %1372 = vmatpush1.bf16.xpose.msra.mxu0 0
    %1373 = vmatprep.subr.bf16.mxu0 0
    %1374 = vmatpush1.bf16.xpose.msra.mxu0 0
    %1375 = vmatprep.subr.bf16.mxu0 0
    %1376 = vmatpush1.bf16.xpose.msra.mxu0 0
    %1377 = vmatprep.subr.bf16.mxu0 0
    %1378 = vmatpush1.bf16.xpose.msra.mxu0 0
    %1379 = vmatprep.subr.bf16.mxu0 0
    %1380 = vmatpush1.bf16.xpose.msra.mxu0 0
    %1381 = vmatprep.subr.bf16.mxu0 0
    %1382 = vmatpush1.bf16.xpose.msra.mxu0 0
    %1383 = vmatprep.subr.bf16.mxu0 0
    %1384 = vmatpush1.bf16.xpose.msra.mxu0 0
    %1385 = vmatprep.subr.bf16.mxu0 0
    %1386 = vmatpush1.bf16.xpose.msra.mxu0 0
    %1387 = vmatprep.subr.bf16.mxu0 0
    %1388 = vmatpush1.bf16.xpose.msra.mxu0 0
    %1389 = vmatprep.mubr.bf16.mxu0 0
    %1390 = vmatmul.mubr.bf16.gmra.mrb[0].mxu0 %v1352
    %v1391 = vpop.f32.mrb[0].mxu0
    %v1392 = vadd.f32 0.0, %v1391
    %v1393 = vpop.f32.mrb[0].mxu0
    %v1394 = vpop.f32.mrb[0].mxu0
    %v1395 = vpop.f32.mrb[0].mxu0
    %1396 = vdwg.mxu0
    %1397 = vrot.lane.b32.xlu0 %v1124, 112
    %v1398 = vpop.permute.xlu0 %1397
    %1399 = vrot.lane.b32.xlu0 %v1124, 80
    %v1400 = vpop.permute.xlu0 %1399
    %v1402 = vsel %vm268, %v1398, 0
    %v1405 = vsel %vm268, %v1400, 0
    %1407 = vmatprep.subr.bf16.mxu0 0
    %1408 = vmatpush1.bf16.xpose.msra.mxu0 %v1405
    %1409 = vmatprep.subr.bf16.mxu0 0
    %1410 = vmatpush1.bf16.xpose.msra.mxu0 0
    %1411 = vmatprep.subr.bf16.mxu0 0
    %1412 = vmatpush1.bf16.xpose.msra.mxu0 0
    %1413 = vmatprep.subr.bf16.mxu0 0
    %1414 = vmatpush1.bf16.xpose.msra.mxu0 0
    %1415 = vmatprep.subr.bf16.mxu0 0
    %1416 = vmatpush1.bf16.xpose.msra.mxu0 0
    %1417 = vmatprep.subr.bf16.mxu0 0
    %1418 = vmatpush1.bf16.xpose.msra.mxu0 0
    %1419 = vmatprep.subr.bf16.mxu0 0
    %1420 = vmatpush1.bf16.xpose.msra.mxu0 0
    %1421 = vmatprep.subr.bf16.mxu0 0
    %1422 = vmatpush1.bf16.xpose.msra.mxu0 0
    %1423 = vmatprep.subr.bf16.mxu0 0
    %1424 = vmatpush1.bf16.xpose.msra.mxu0 0
    %1425 = vmatprep.subr.bf16.mxu0 0
    %1426 = vmatpush1.bf16.xpose.msra.mxu0 0
    %1427 = vmatprep.subr.bf16.mxu0 0
    %1428 = vmatpush1.bf16.xpose.msra.mxu0 0
    %1429 = vmatprep.subr.bf16.mxu0 0
    %1430 = vmatpush1.bf16.xpose.msra.mxu0 0
    %1431 = vmatprep.subr.bf16.mxu0 0
    %1432 = vmatpush1.bf16.xpose.msra.mxu0 0
    %1433 = vmatprep.subr.bf16.mxu0 0
    %1434 = vmatpush1.bf16.xpose.msra.mxu0 0
    %1435 = vmatprep.subr.bf16.mxu0 0
    %1436 = vmatpush1.bf16.xpose.msra.mxu0 0
    %1437 = vmatprep.subr.bf16.mxu0 0
    %1438 = vmatpush1.bf16.xpose.msra.mxu0 0
    %1439 = vmatprep.mubr.bf16.mxu0 0
    %1440 = vmatmul.mubr.bf16.gmra.mrb[0].mxu0 %v1402
    %v1441 = vpop.f32.mrb[0].mxu0
    %v1442 = vadd.f32 0.0, %v1441
    %v1443 = vpop.f32.mrb[0].mxu0
    %v1444 = vpop.f32.mrb[0].mxu0
    %v1445 = vpop.f32.mrb[0].mxu0
    %1446 = vdwg.mxu0
    %v1447 = vmul.f32 %v1392, 0.25
    %v1448 = vmul.f32 %v1442, 0.25
    %v1449 = vsel %vm367, %v1447, -1e+09
    %v1450 = vsel %vm367, %v1448, -1e+09
    %v1451 = vsel %vm370, %v1449, -inf
    %1452 = vmax.xlane.f32.xlu0 %v1451
    %v1453 = vpop.xlane.xlu0 %1452
    %v1454 = vsel %vm370, %v1450, -inf
    %1455 = vmax.xlane.f32.xlu0 %v1454
    %v1456 = vpop.xlane.xlu0 %1455
    %v1457 = vsub.f32 %v1449, %v1453
    %v1458 = vsub.f32 %v1450, %v1456
    %v1459 = vmul.f32 %v1457, 1.442695
    %v1460 = vpow.pop %v1459
    %v1461 = vmul.f32 %v1458, 1.442695
    %v1462 = vpow.pop %v1461
    %v1463 = vsel %vm370, %v1460, 0.0
    %1464 = vadd.xlane.f32.xlu0 %v1463
    %v1465 = vpop.xlane.xlu0 %1464
    %v1466 = vsel %vm370, %v1462, 0.0
    %1467 = vadd.xlane.f32.xlu0 %v1466
    %v1468 = vpop.xlane.xlu0 %1467
    %v1469 = vrcp.pop %v1465
    %v1470 = vrcp.pop %v1468
    %v1471 = vmul.f32 %v1460, %v1469
    %v1472 = vmul.f32 %v1462, %v1470
    %v1473 = vpack.c.bf16 %v1471, %v1471
    %v1474 = vpack.c.bf16 %v1472, %v1472
    %1475 = vrot.lane.b32.xlu0 %v1123, 48
    %v1476 = vpop.permute.xlu0 %1475
    %v1478 = vsel %vm370, %v1473, 0
    %v1481 = vsel %vm142, %v1476, 0
    %1483 = vmatprep.subr.bf16.mxu0 0
    %1484 = vmatpush1.bf16.msra.mxu0 %v1481
    %1485 = vmatprep.subr.bf16.mxu0 0
    %1486 = vmatpush1.bf16.msra.mxu0 0
    %1487 = vmatprep.subr.bf16.mxu0 0
    %1488 = vmatpush1.bf16.msra.mxu0 0
    %1489 = vmatprep.subr.bf16.mxu0 0
    %1490 = vmatpush1.bf16.msra.mxu0 0
    %1491 = vmatprep.subr.bf16.mxu0 0
    %1492 = vmatpush1.bf16.msra.mxu0 0
    %1493 = vmatprep.subr.bf16.mxu0 0
    %1494 = vmatpush1.bf16.msra.mxu0 0
    %1495 = vmatprep.subr.bf16.mxu0 0
    %1496 = vmatpush1.bf16.msra.mxu0 0
    %1497 = vmatprep.subr.bf16.mxu0 0
    %1498 = vmatpush1.bf16.msra.mxu0 0
    %1499 = vmatprep.subr.bf16.mxu0 0
    %1500 = vmatpush1.bf16.msra.mxu0 0
    %1501 = vmatprep.subr.bf16.mxu0 0
    %1502 = vmatpush1.bf16.msra.mxu0 0
    %1503 = vmatprep.subr.bf16.mxu0 0
    %1504 = vmatpush1.bf16.msra.mxu0 0
    %1505 = vmatprep.subr.bf16.mxu0 0
    %1506 = vmatpush1.bf16.msra.mxu0 0
    %1507 = vmatprep.subr.bf16.mxu0 0
    %1508 = vmatpush1.bf16.msra.mxu0 0
    %1509 = vmatprep.subr.bf16.mxu0 0
    %1510 = vmatpush1.bf16.msra.mxu0 0
    %1511 = vmatprep.subr.bf16.mxu0 0
    %1512 = vmatpush1.bf16.msra.mxu0 0
    %1513 = vmatprep.subr.bf16.mxu0 0
    %1514 = vmatpush1.bf16.msra.mxu0 0
    %1515 = vmatprep.mubr.bf16.mxu0 0
    %1516 = vmatmul.mubr.bf16.gmra.mrb[0].mxu0 %v1478
    %v1517 = vpop.f32.mrb[0].mxu0
    %v1518 = vadd.f32 0.0, %v1517
    %v1519 = vpop.f32.mrb[0].mxu0
    %v1520 = vpop.f32.mrb[0].mxu0
    %v1521 = vpop.f32.mrb[0].mxu0
    %1522 = vdwg.mxu0
    %1523 = vrot.lane.b32.xlu0 %v1124, 48
    %v1524 = vpop.permute.xlu0 %1523
    %v1526 = vsel %vm370, %v1474, 0
    %v1529 = vsel %vm142, %v1524, 0
    %1531 = vmatprep.subr.bf16.mxu0 0
    %1532 = vmatpush1.bf16.msra.mxu0 %v1529
    %1533 = vmatprep.subr.bf16.mxu0 0
    %1534 = vmatpush1.bf16.msra.mxu0 0
    %1535 = vmatprep.subr.bf16.mxu0 0
    %1536 = vmatpush1.bf16.msra.mxu0 0
    %1537 = vmatprep.subr.bf16.mxu0 0
    %1538 = vmatpush1.bf16.msra.mxu0 0
    %1539 = vmatprep.subr.bf16.mxu0 0
    %1540 = vmatpush1.bf16.msra.mxu0 0
    %1541 = vmatprep.subr.bf16.mxu0 0
    %1542 = vmatpush1.bf16.msra.mxu0 0
    %1543 = vmatprep.subr.bf16.mxu0 0
    %1544 = vmatpush1.bf16.msra.mxu0 0
    %1545 = vmatprep.subr.bf16.mxu0 0
    %1546 = vmatpush1.bf16.msra.mxu0 0
    %1547 = vmatprep.subr.bf16.mxu0 0
    %1548 = vmatpush1.bf16.msra.mxu0 0
    %1549 = vmatprep.subr.bf16.mxu0 0
    %1550 = vmatpush1.bf16.msra.mxu0 0
    %1551 = vmatprep.subr.bf16.mxu0 0
    %1552 = vmatpush1.bf16.msra.mxu0 0
    %1553 = vmatprep.subr.bf16.mxu0 0
    %1554 = vmatpush1.bf16.msra.mxu0 0
    %1555 = vmatprep.subr.bf16.mxu0 0
    %1556 = vmatpush1.bf16.msra.mxu0 0
    %1557 = vmatprep.subr.bf16.mxu0 0
    %1558 = vmatpush1.bf16.msra.mxu0 0
    %1559 = vmatprep.subr.bf16.mxu0 0
    %1560 = vmatpush1.bf16.msra.mxu0 0
    %1561 = vmatprep.subr.bf16.mxu0 0
    %1562 = vmatpush1.bf16.msra.mxu0 0
    %1563 = vmatprep.mubr.bf16.mxu0 0
    %1564 = vmatmul.mubr.bf16.gmra.mrb[0].mxu0 %v1526
    %v1565 = vpop.f32.mrb[0].mxu0
    %v1566 = vadd.f32 0.0, %v1565
    %v1567 = vpop.f32.mrb[0].mxu0
    %v1568 = vpop.f32.mrb[0].mxu0
    %v1569 = vpop.f32.mrb[0].mxu0
    %1570 = vdwg.mxu0
    %1573 = vrot.lane.b32.xlu0 %v1518, 16
    %v1574 = vpop.permute.xlu0 %1573
    %1575 = vrot.lane.b32.xlu0 %v1566, 16
    %v1576 = vpop.permute.xlu0 %1575
    %v1579 = vsel %vm268, %v1294, %v1574
    %v1580 = vsel %vm268, %v1342, %v1576
    %v1581 = vpack.c.bf16 %v1580, %v1579
    %v1582 = vlaneseq
    %v1583 = vshrl.u32 %v1582, 7
    %v1584 = vsub.s32 0, %v1583
    %v1585 = vrot.slane %v1055, %v1584
    %v1590 = vunpack.c.l.b16 %v1029
    %v1591 = vunpack.c.l.b16 %v1030
    %v1592 = vunpack.c.l.b16 %v1031
    %v1593 = vunpack.c.l.b16 %v1032
    %v1594 = vpack.c.b16 %v1591, %v1590
    %v1595 = vpack.c.b16 %v1593, %v1592
    %v1599 = vsel %vm218, %v1581, 0
    %1601 = vmatprep.subr.bf16.mxu0 0
    %1602 = vmatpush1.bf16.msra.mxu0 %v1594
    %1603 = vmatprep.subr.bf16.mxu0 0
    %1604 = vmatpush1.bf16.msra.mxu0 %v1595
    %1605 = vmatprep.subr.bf16.mxu0 0
    %1606 = vmatpush1.bf16.msra.mxu0 0
    %1607 = vmatprep.subr.bf16.mxu0 0
    %1608 = vmatpush1.bf16.msra.mxu0 0
    %1609 = vmatprep.subr.bf16.mxu0 0
    %1610 = vmatpush1.bf16.msra.mxu0 0
    %1611 = vmatprep.subr.bf16.mxu0 0
    %1612 = vmatpush1.bf16.msra.mxu0 0
    %1613 = vmatprep.subr.bf16.mxu0 0
    %1614 = vmatpush1.bf16.msra.mxu0 0
    %1615 = vmatprep.subr.bf16.mxu0 0
    %1616 = vmatpush1.bf16.msra.mxu0 0
    %1617 = vmatprep.subr.bf16.mxu0 0
    %1618 = vmatpush1.bf16.msra.mxu0 0
    %1619 = vmatprep.subr.bf16.mxu0 0
    %1620 = vmatpush1.bf16.msra.mxu0 0
    %1621 = vmatprep.subr.bf16.mxu0 0
    %1622 = vmatpush1.bf16.msra.mxu0 0
    %1623 = vmatprep.subr.bf16.mxu0 0
    %1624 = vmatpush1.bf16.msra.mxu0 0
    %1625 = vmatprep.subr.bf16.mxu0 0
    %1626 = vmatpush1.bf16.msra.mxu0 0
    %1627 = vmatprep.subr.bf16.mxu0 0
    %1628 = vmatpush1.bf16.msra.mxu0 0
    %1629 = vmatprep.subr.bf16.mxu0 0
    %1630 = vmatpush1.bf16.msra.mxu0 0
    %1631 = vmatprep.subr.bf16.mxu0 0
    %1632 = vmatpush1.bf16.msra.mxu0 0
    %1633 = vmatprep.mubr.bf16.mxu0 0
    %1634 = vmatmul.mubr.bf16.gmra.mrb[0].mxu0 %v1599
    %v1635 = vpop.f32.mrb[0].mxu0
    %v1636 = vadd.f32 %v1585, %v1635
    %v1637 = vpop.f32.mrb[0].mxu0
    %v1638 = vpop.f32.mrb[0].mxu0
    %v1639 = vadd.f32 %v1585, %v1638
    %v1640 = vpop.f32.mrb[0].mxu0
    %1641 = vdwg.mxu0
    %v1642 = vadd.f32 %v1022, %v1636
    %v1643 = vadd.f32 %v1023, %v1639
    %v1644 = vsel %vm218, %v1642, 0.0
    %1645 = vadd.xlane.f32.xlu0 %v1644
    %v1646 = vpop.xlane.xlu0 %1645
    %v1647 = vsel %vm218, %v1643, 0.0
    %1648 = vadd.xlane.f32.xlu0 %v1647
    %v1649 = vpop.xlane.xlu0 %1648
    %v1650 = vmul.f32 %v1646, %v794
    %v1651 = vmul.f32 %v1649, %v794
    %v1652 = vsub.f32 %v1642, %v1650
    %v1653 = vsub.f32 %v1643, %v1651
    %v1654 = vmul.f32 %v1652, %v1652
    %v1655 = vmul.f32 %v1653, %v1653
    %v1656 = vsel %vm218, %v1654, 0.0
    %1657 = vadd.xlane.f32.xlu0 %v1656
    %v1658 = vpop.xlane.xlu0 %1657
    %v1659 = vsel %vm218, %v1655, 0.0
    %1660 = vadd.xlane.f32.xlu0 %v1659
    %v1661 = vpop.xlane.xlu0 %1660
    %v1662 = vmul.f32 %v1658, %v794
    %v1663 = vmul.f32 %v1661, %v794
    %v1664 = vadd.f32 %v1662, 1e-05
    %v1665 = vadd.f32 %v1663, 1e-05
    %v1666 = vrsqrt.pop %v1664
    %v1667 = vrsqrt.pop %v1665
    %v1668 = vmul.f32 %v1652, %v1666
    %v1669 = vmul.f32 %v1653, %v1667
    %v1670 = vlaneseq
    %v1671 = vshrl.u32 %v1670, 7
    %v1672 = vsub.s32 0, %v1671
    %v1673 = vrot.slane %v1056, %v1672
    %v1674 = vmul.f32 %v1668, %v1673
    %v1675 = vmul.f32 %v1669, %v1673
    %v1676 = vlaneseq
    %v1677 = vshrl.u32 %v1676, 7
    %v1678 = vsub.s32 0, %v1677
    %v1679 = vrot.slane %v1057, %v1678
    %v1680 = vadd.f32 %v1674, %v1679
    %v1681 = vadd.f32 %v1675, %v1679
    %v1682 = vpack.c.bf16 %v1681, %v1680
    %v1683 = vlaneseq
    %v1684 = vshrl.u32 %v1683, 7
    %v1685 = vsub.s32 0, %v1684
    %v1686 = vrot.slane %v1058, %v1685
    %v1691 = vunpack.c.l.b16 %v1033
    %v1692 = vunpack.c.l.b16 %v1034
    %v1693 = vunpack.c.l.b16 %v1035
    %v1694 = vunpack.c.l.b16 %v1036
    %v1695 = vpack.c.b16 %v1692, %v1691
    %v1696 = vpack.c.b16 %v1694, %v1693
    %v1700 = vsel %vm218, %v1682, 0
    %1702 = vmatprep.subr.bf16.mxu0 0
    %1703 = vmatpush1.bf16.msra.mxu0 %v1695
    %1704 = vmatprep.subr.bf16.mxu0 0
    %1705 = vmatpush1.bf16.msra.mxu0 %v1696
    %1706 = vmatprep.subr.bf16.mxu0 0
    %1707 = vmatpush1.bf16.msra.mxu0 0
    %1708 = vmatprep.subr.bf16.mxu0 0
    %1709 = vmatpush1.bf16.msra.mxu0 0
    %1710 = vmatprep.subr.bf16.mxu0 0
    %1711 = vmatpush1.bf16.msra.mxu0 0
    %1712 = vmatprep.subr.bf16.mxu0 0
    %1713 = vmatpush1.bf16.msra.mxu0 0
    %1714 = vmatprep.subr.bf16.mxu0 0
    %1715 = vmatpush1.bf16.msra.mxu0 0
    %1716 = vmatprep.subr.bf16.mxu0 0
    %1717 = vmatpush1.bf16.msra.mxu0 0
    %1718 = vmatprep.subr.bf16.mxu0 0
    %1719 = vmatpush1.bf16.msra.mxu0 0
    %1720 = vmatprep.subr.bf16.mxu0 0
    %1721 = vmatpush1.bf16.msra.mxu0 0
    %1722 = vmatprep.subr.bf16.mxu0 0
    %1723 = vmatpush1.bf16.msra.mxu0 0
    %1724 = vmatprep.subr.bf16.mxu0 0
    %1725 = vmatpush1.bf16.msra.mxu0 0
    %1726 = vmatprep.subr.bf16.mxu0 0
    %1727 = vmatpush1.bf16.msra.mxu0 0
    %1728 = vmatprep.subr.bf16.mxu0 0
    %1729 = vmatpush1.bf16.msra.mxu0 0
    %1730 = vmatprep.subr.bf16.mxu0 0
    %1731 = vmatpush1.bf16.msra.mxu0 0
    %1732 = vmatprep.subr.bf16.mxu0 0
    %1733 = vmatpush1.bf16.msra.mxu0 0
    %1734 = vmatprep.mubr.bf16.mxu0 0
    %1735 = vmatmul.mubr.bf16.gmra.mrb[0].mxu0 %v1700
    %v1736 = vpop.f32.mrb[0].mxu0
    %v1737 = vadd.f32 %v1686, %v1736
    %v1738 = vpop.f32.mrb[0].mxu0
    %v1739 = vpop.f32.mrb[0].mxu0
    %v1740 = vadd.f32 %v1686, %v1739
    %v1741 = vpop.f32.mrb[0].mxu0
    %1742 = vdwg.mxu0
    %v1743 = vmax.f32 %v1737, 0.0
    %v1744 = vmax.f32 %v1740, 0.0
    %v1745 = vpack.c.bf16 %v1744, %v1743
    %v1746 = vlaneseq
    %v1747 = vshrl.u32 %v1746, 7
    %v1748 = vsub.s32 0, %v1747
    %v1749 = vrot.slane %v1059, %v1748
    %v1766 = vunpack.c.l.b16 %v1037
    %v1767 = vunpack.c.l.b16 %v1038
    %v1768 = vunpack.c.l.b16 %v1039
    %v1769 = vunpack.c.l.b16 %v1040
    %v1770 = vunpack.c.l.b16 %v1041
    %v1771 = vunpack.c.l.b16 %v1042
    %v1772 = vunpack.c.l.b16 %v1043
    %v1773 = vunpack.c.l.b16 %v1044
    %v1774 = vunpack.c.l.b16 %v1045
    %v1775 = vunpack.c.l.b16 %v1046
    %v1776 = vunpack.c.l.b16 %v1047
    %v1777 = vunpack.c.l.b16 %v1048
    %v1778 = vunpack.c.l.b16 %v1049
    %v1779 = vunpack.c.l.b16 %v1050
    %v1780 = vunpack.c.l.b16 %v1051
    %v1781 = vunpack.c.l.b16 %v1052
    %v1782 = vpack.c.b16 %v1767, %v1766
    %v1783 = vpack.c.b16 %v1769, %v1768
    %v1784 = vpack.c.b16 %v1771, %v1770
    %v1785 = vpack.c.b16 %v1773, %v1772
    %v1786 = vpack.c.b16 %v1775, %v1774
    %v1787 = vpack.c.b16 %v1777, %v1776
    %v1788 = vpack.c.b16 %v1779, %v1778
    %v1789 = vpack.c.b16 %v1781, %v1780
    %1798 = vmatprep.subr.bf16.mxu0 0
    %1799 = vmatpush1.bf16.msra.mxu0 %v1782
    %1800 = vmatprep.subr.bf16.mxu0 0
    %1801 = vmatpush1.bf16.msra.mxu0 %v1783
    %1802 = vmatprep.subr.bf16.mxu0 0
    %1803 = vmatpush1.bf16.msra.mxu0 %v1784
    %1804 = vmatprep.subr.bf16.mxu0 0
    %1805 = vmatpush1.bf16.msra.mxu0 %v1785
    %1806 = vmatprep.subr.bf16.mxu0 0
    %1807 = vmatpush1.bf16.msra.mxu0 %v1786
    %1808 = vmatprep.subr.bf16.mxu0 0
    %1809 = vmatpush1.bf16.msra.mxu0 %v1787
    %1810 = vmatprep.subr.bf16.mxu0 0
    %1811 = vmatpush1.bf16.msra.mxu0 %v1788
    %1812 = vmatprep.subr.bf16.mxu0 0
    %1813 = vmatpush1.bf16.msra.mxu0 %v1789
    %1814 = vmatprep.subr.bf16.mxu0 0
    %1815 = vmatpush1.bf16.msra.mxu0 0
    %1816 = vmatprep.subr.bf16.mxu0 0
    %1817 = vmatpush1.bf16.msra.mxu0 0
    %1818 = vmatprep.subr.bf16.mxu0 0
    %1819 = vmatpush1.bf16.msra.mxu0 0
    %1820 = vmatprep.subr.bf16.mxu0 0
    %1821 = vmatpush1.bf16.msra.mxu0 0
    %1822 = vmatprep.subr.bf16.mxu0 0
    %1823 = vmatpush1.bf16.msra.mxu0 0
    %1824 = vmatprep.subr.bf16.mxu0 0
    %1825 = vmatpush1.bf16.msra.mxu0 0
    %1826 = vmatprep.subr.bf16.mxu0 0
    %1827 = vmatpush1.bf16.msra.mxu0 0
    %1828 = vmatprep.subr.bf16.mxu0 0
    %1829 = vmatpush1.bf16.msra.mxu0 0
    %1830 = vmatprep.mubr.bf16.mxu0 0
    %1831 = vmatmul.mubr.bf16.gmra.mrb[0].mxu0 %v1745
    %v1832 = vpop.f32.mrb[0].mxu0
    %v1833 = vadd.f32 %v1749, %v1832
    %v1834 = vpop.f32.mrb[0].mxu0
    %v1835 = vpop.f32.mrb[0].mxu0
    %v1836 = vadd.f32 %v1749, %v1835
    %v1837 = vpop.f32.mrb[0].mxu0
    %1838 = vdwg.mxu0
    %v1839 = vadd.f32 %v1680, %v1833
    %v1840 = vadd.f32 %v1681, %v1836
    %v1841 = vsel %vm218, %v1839, 0.0
    %1842 = vadd.xlane.f32.xlu0 %v1841
    %v1843 = vpop.xlane.xlu0 %1842
    %v1844 = vsel %vm218, %v1840, 0.0
    %1845 = vadd.xlane.f32.xlu0 %v1844
    %v1846 = vpop.xlane.xlu0 %1845
    %v1847 = vmul.f32 %v1843, %v794
    %v1848 = vmul.f32 %v1846, %v794
    %v1849 = vsub.f32 %v1839, %v1847
    %v1850 = vsub.f32 %v1840, %v1848
    %v1851 = vmul.f32 %v1849, %v1849
    %v1852 = vmul.f32 %v1850, %v1850
    %v1853 = vsel %vm218, %v1851, 0.0
    %1854 = vadd.xlane.f32.xlu0 %v1853
    %v1855 = vpop.xlane.xlu0 %1854
    %v1856 = vsel %vm218, %v1852, 0.0
    %1857 = vadd.xlane.f32.xlu0 %v1856
    %v1858 = vpop.xlane.xlu0 %1857
    %v1859 = vmul.f32 %v1855, %v794
    %v1860 = vmul.f32 %v1858, %v794
    %v1861 = vadd.f32 %v1859, 1e-05
    %v1862 = vadd.f32 %v1860, 1e-05
    %v1863 = vrsqrt.pop %v1861
    %v1864 = vrsqrt.pop %v1862
    %v1865 = vmul.f32 %v1849, %v1863
    %v1866 = vmul.f32 %v1850, %v1864
    %v1867 = vlaneseq
    %v1868 = vshrl.u32 %v1867, 7
    %v1869 = vsub.s32 0, %v1868
    %v1870 = vrot.slane %v1060, %v1869
    %v1871 = vmul.f32 %v1865, %v1870
    %v1872 = vmul.f32 %v1866, %v1870
    %v1873 = vlaneseq
    %v1874 = vshrl.u32 %v1873, 7
    %v1875 = vsub.s32 0, %v1874
    %v1876 = vrot.slane %v1061, %v1875
    %v1877 = vadd.f32 %v1871, %v1876
    %v1878 = vadd.f32 %v1872, %v1876
    %v1879 = vpack.c.bf16 %v1878, %v1877
    %v1880 = vld [vmem:[%s5] sm:$0xf]
    %v1881 = vld [vmem:[%s5 + $0x4] sm:$0xf]
    %v1882 = vld [vmem:[%s5 + $0x8] sm:$0xf]
    %v1883 = vld [vmem:[%s5 + $0xc] sm:$0xf]
    %v1884 = vld [vmem:[%s6] sm:$0x1]
    %v1886 = vlaneseq
    %v1887 = vshrl.u32 %v1886, 7
    %v1888 = vsub.s32 0, %v1887
    %v1889 = vrot.slane %v1884, %v1888
    %v1895 = vunpack.c.l.b16 %v1880
    %v1896 = vunpack.c.l.b16 %v1881
    %v1897 = vunpack.c.l.b16 %v1882
    %v1898 = vunpack.c.l.b16 %v1883
    %v1899 = vpack.c.b16 %v1896, %v1895
    %v1900 = vpack.c.b16 %v1898, %v1897
    %v1904 = vsel %vm218, %v1879, 0
    %1906 = vmatprep.subr.bf16.mxu0 0
    %1907 = vmatpush1.bf16.msra.mxu0 %v1899
    %1908 = vmatprep.subr.bf16.mxu0 0
    %1909 = vmatpush1.bf16.msra.mxu0 %v1900
    %1910 = vmatprep.subr.bf16.mxu0 0
    %1911 = vmatpush1.bf16.msra.mxu0 0
    %1912 = vmatprep.subr.bf16.mxu0 0
    %1913 = vmatpush1.bf16.msra.mxu0 0
    %1914 = vmatprep.subr.bf16.mxu0 0
    %1915 = vmatpush1.bf16.msra.mxu0 0
    %1916 = vmatprep.subr.bf16.mxu0 0
    %1917 = vmatpush1.bf16.msra.mxu0 0
    %1918 = vmatprep.subr.bf16.mxu0 0
    %1919 = vmatpush1.bf16.msra.mxu0 0
    %1920 = vmatprep.subr.bf16.mxu0 0
    %1921 = vmatpush1.bf16.msra.mxu0 0
    %1922 = vmatprep.subr.bf16.mxu0 0
    %1923 = vmatpush1.bf16.msra.mxu0 0
    %1924 = vmatprep.subr.bf16.mxu0 0
    %1925 = vmatpush1.bf16.msra.mxu0 0
    %1926 = vmatprep.subr.bf16.mxu0 0
    %1927 = vmatpush1.bf16.msra.mxu0 0
    %1928 = vmatprep.subr.bf16.mxu0 0
    %1929 = vmatpush1.bf16.msra.mxu0 0
    %1930 = vmatprep.subr.bf16.mxu0 0
    %1931 = vmatpush1.bf16.msra.mxu0 0
    %1932 = vmatprep.subr.bf16.mxu0 0
    %1933 = vmatpush1.bf16.msra.mxu0 0
    %1934 = vmatprep.subr.bf16.mxu0 0
    %1935 = vmatpush1.bf16.msra.mxu0 0
    %1936 = vmatprep.subr.bf16.mxu0 0
    %1937 = vmatpush1.bf16.msra.mxu0 0
    %1938 = vmatprep.mubr.bf16.mxu0 0
    %1939 = vmatmul.mubr.bf16.gmra.mrb[0].mxu0 %v1904
    %v1940 = vpop.f32.mrb[0].mxu0
    %v1941 = vadd.f32 %v1889, %v1940
    %v1942 = vpop.f32.mrb[0].mxu0
    %v1943 = vpop.f32.mrb[0].mxu0
    %v1944 = vadd.f32 %v1889, %v1943
    %v1945 = vpop.f32.mrb[0].mxu0
    %1946 = vdwg.mxu0
    %1947 = vst [vmem:[#allocation7] sm:$0xff] %v1941
    %1948 = vst [vmem:[#allocation7 + $0x8] sm:$0xff] %v1944
    // Predicated region
    $region30: #{_gpt_forward_impl.1} parent=1 // pred_check
      _
    $region31: #{_gpt_forward_impl.1} parent=1 // pred_check_branch
      %1950 = sbr.rel (0) target = $region33
    $region32: #{_gpt_forward_impl.1} parent=1 // pred_region
      %s1952 = ssub.s32 256, 256
      %1953 = vsyncadd [#allocation6], %s1952
      %s1954 = sshll.u32 [#allocation7], 4
      %s1955 = int_to_ptr.vmem [resolvable:$true] %s1954
      %1960 = dma.vmem_to_hbm [thread:$0]  %s1955, 256, %s7, [#allocation6], 128, 128, 8
    $region33: #{_gpt_forward_impl.1} parent=1 // pred_fallthru
      _
    // Predicated region
    $region34: #{_gpt_forward_impl.1} parent=1 // pred_check
      _
    $region35: #{_gpt_forward_impl.1} parent=1 // pred_check_branch
      %1962 = sbr.rel (0) target = $region37
    $region36: #{_gpt_forward_impl.1} parent=1 // pred_region
      %1963 = dma.done [#allocation6], 256
    $region37: #{_gpt_forward_impl.1} parent=1 // pred_fallthru
      _
    %1964 = vsyncpa [#allocation5], 1
    %1965 = vsyncpa [#allocation6], 1

</llo_original>
